<compile_context>
chip_gen: v6e
topology: v6e:2x2x1
jax: 0.10.0
libtpu: 0.0.40
codegen_flags: <defaults>
</compile_context>

<pallas_src>
import jax
import jax.numpy as jnp
from jax.experimental import pallas as pl
from jax.experimental.pallas import tpu as pltpu

_EPS = 1e-5


# ----------------------------------------------------------------------------
# In-kernel helpers (traced inside the Pallas kernels).
# ----------------------------------------------------------------------------
def _banded_conv(pad_ref, w_ref, H):
    """3x3 conv in banded (w,c) layout: out[h] = sum_kh pad[h+kh] @ W_kh.

    pad_ref: (H+2, WC) bf16 zero-halo rows; w_ref: (3, WC, WC) bf16 banded
    weights.  Returns (H, WC) f32 accumulator (3 MXU matmuls, dense K/N).
    """
    WC = pad_ref.shape[-1]
    acc = jnp.zeros((H, WC), jnp.float32)
    for kh in range(3):
        acc = acc + jnp.dot(pad_ref[kh:kh + H, :], w_ref[kh],
                            preferred_element_type=jnp.float32)
    return acc


def _fill_padded(pad_ref, rows_f32, H):
    """Write H interior rows (bf16) and the two zero halo rows."""
    zrow = jnp.zeros((1, pad_ref.shape[-1]), pad_ref.dtype)
    pad_ref[0:1, :] = zrow                      # top halo
    pad_ref[H + 1:H + 2, :] = zrow              # bottom halo
    pad_ref[1:H + 1, :] = rows_f32.astype(pad_ref.dtype)


def _write_conv_and_stats(acc, conv_ref, stats_ref):
    """Store raw conv output (bf16) + one stacked (2, WC) stats store."""
    conv_ref[0] = acc.astype(conv_ref.dtype)
    stats_ref[0] = jnp.concatenate(
        [jnp.sum(acc, axis=0, keepdims=True),
         jnp.sum(acc * acc, axis=0, keepdims=True)], axis=0)


# ----------------------------------------------------------------------------
# Kernel 1: conv1 (raw) + per-sample BN1 partial stats.
# ----------------------------------------------------------------------------
def _conv1_stats_kernel(x_ref, w_ref, conv_ref, stats_ref, pad_ref):
    # x_ref    : (1, H, WC) f32 packed input sample (WC = W*C = 128 lanes)
    # w_ref    : (3, WC, WC) bf16 banded conv1 weights
    # conv_ref : (1, H, WC) bf16 raw conv1 output
    # stats_ref: (1, 2, WC) f32 per-sample [sum, sum_of_squares] per (w,c) lane
    # pad_ref  : (H+2, WC)  bf16 VMEM scratch (zero halo rows)
    H = x_ref.shape[1]
    _fill_padded(pad_ref, x_ref[0], H)
    acc = _banded_conv(pad_ref, w_ref, H)
    _write_conv_and_stats(acc, conv_ref, stats_ref)


# ----------------------------------------------------------------------------
# Kernel 2: BN1 normalize + ReLU + conv2 (raw) + per-sample BN2 partial stats.
# The normalized intermediate lives only in the VMEM scratch.
# ----------------------------------------------------------------------------
def _bn_relu_conv2_stats_kernel(y_ref, scale_ref, shift_ref, w_ref,
                                conv_ref, stats_ref, pad_ref):
    # y_ref       : (1, H, WC) bf16 raw conv1 output
    # scale/shift : (1, WC)    f32 fused BN1 scale/shift per (w,c) lane
    # w_ref       : (3, WC, WC) bf16 banded conv2 weights
    # conv_ref    : (1, H, WC) bf16 raw conv2 output
    # stats_ref   : (1, 2, WC) f32
    # pad_ref     : (H+2, WC)  bf16 VMEM scratch
    H = y_ref.shape[1]
    # Elementwise math in f32 (v5e has no bf16 VPU); cast to bf16 at the store.
    yn = jnp.maximum(
        y_ref[0].astype(jnp.float32) * scale_ref[...] + shift_ref[...], 0.0)
    _fill_padded(pad_ref, yn, H)
    acc = _banded_conv(pad_ref, w_ref, H)
    _write_conv_and_stats(acc, conv_ref, stats_ref)


# ----------------------------------------------------------------------------
# Kernel 3: BN2 normalize + residual add + ReLU (single full-width store).
# ----------------------------------------------------------------------------
def _bn_add_relu_kernel(y_ref, scale_ref, shift_ref, res_ref, out_ref):
    # y_ref  : (1, H, WC) bf16 raw conv2 output
    # res_ref: (1, H, WC) f32  packed input sample (residual, downsample=None)
    # out_ref: (1, H, WC) f32  final output (all lanes are real data)
    yn = y_ref[0].astype(jnp.float32) * scale_ref[...] + shift_ref[...]
    out_ref[0] = jnp.maximum(yn + res_ref[0], 0.0)


# ----------------------------------------------------------------------------
# Parameter construction / packing.
# ----------------------------------------------------------------------------
def init_basic_block_params(key, inplanes, planes):
    """Raw parameters in PyTorch layout (also used by the pure-JAX reference)."""
    k1, k2, k3, k4, k5, k6 = jax.random.split(key, 6)
    return dict(
        w1=0.1 * jax.random.normal(k1, (planes, inplanes, 3, 3), jnp.float32),
        w2=0.1 * jax.random.normal(k2, (planes, planes, 3, 3), jnp.float32),
        gamma1=1.0 + 0.1 * jax.random.normal(k3, (planes,), jnp.float32),
        beta1=0.1 * jax.random.normal(k4, (planes,), jnp.float32),
        gamma2=1.0 + 0.1 * jax.random.normal(k5, (planes,), jnp.float32),
        beta2=0.1 * jax.random.normal(k6, (planes,), jnp.float32),
    )


def pack_params(raw, width):
    """PyTorch-layout params -> banded (w,c) lane-dense kernel layout.

    For each kh, W_kh[(w_in,c_in),(w_out,c_out)] = w[c_out,c_in,kh,w_in-w_out+1]
    when |w_in - w_out| <= 1, else 0 (the zero blocks realize the kw padding).
    """
    def pack_banded(w_oihw):
        cin = w_oihw.shape[1]
        cout = w_oihw.shape[0]
        bands = []
        for kh in range(3):
            b = jnp.zeros((width * cin, width * cout), jnp.float32)
            for kw in range(3):
                tap = w_oihw[:, :, kh, kw].T                       # (cin, cout)
                sel = jnp.eye(width, width, k=1 - kw, dtype=jnp.float32)
                b = b + jnp.kron(sel, tap)
            bands.append(b)
        return jnp.stack(bands).astype(jnp.bfloat16)               # (3, WC, WC)

    return dict(w1=pack_banded(raw["w1"]), w2=pack_banded(raw["w2"]),
                gamma1=raw["gamma1"].astype(jnp.float32),
                beta1=raw["beta1"].astype(jnp.float32),
                gamma2=raw["gamma2"].astype(jnp.float32),
                beta2=raw["beta2"].astype(jnp.float32))


def _bn_scale_shift_lanes(partial_stats, gamma, beta, count, width, C):
    """Tiny XLA reduction: per-sample (sum, sumsq) partials in (w,c) lane
    layout -> per-channel fused BN scale/shift -> broadcast back to lanes."""
    tot = jnp.sum(partial_stats, axis=0)                  # (2, W*C)
    tot = tot.reshape(2, width, C).sum(axis=1)            # (2, C)
    mean = tot[0] / count
    # NOTE: E[x^2]-E[x]^2 in f32; fine at this scale.  Use two-pass / Welford
    # for very large N*H*W (catastrophic-cancellation risk).
    var = jnp.maximum(tot[1] / count - mean * mean, 0.0)  # biased variance
    scale = gamma * jax.lax.rsqrt(var + _EPS)             # (C,)
    shift = beta - mean * scale
    # Per-channel -> per-(w,c) lane vector: lane = w*C + c -> value[c].
    return (jnp.tile(scale, width).reshape(1, width * C),
            jnp.tile(shift, width).reshape(1, width * C))


# ----------------------------------------------------------------------------
# Forward wrapper.
# ----------------------------------------------------------------------------
def basic_block_forward(x_nchw, params, num_classes=10):
    # PyTorch: `if len(x[0]) == self.num_classes: return x` (channel count).
    if x_nchw.shape[1] == num_classes:
        return x_nchw

    N, C, H, W = x_nchw.shape
    WC = W * C
    # Banded lane packing requires one image row to fill the 128 lanes exactly.
    assert WC == 128, "this kernel requires W * C == 128 (e.g. C=8, W=16)"

    # NCHW -> NHWC -> (N, H, W*C): lane-dense, zero channel padding anywhere.
    x = jnp.transpose(x_nchw, (0, 2, 3, 1)).astype(jnp.float32).reshape(N, H, WC)
    count = float(N * H * W)

    cparams = pltpu.CompilerParams(
        dimension_semantics=("parallel",),        # batch axis -> both v7x TCs
        vmem_limit_bytes=32 * 1024 * 1024)        # fits v5e/v6e/v7x budgets
    # NOTE: grid is batch-only; with small N there is little DMA overlap, but
    # per-step footprints here are ~100s of KiB so the kernel is overhead /
    # compute bound, not DMA bound.  Add an H-tile axis for large images.
    grid = (N,)

    samp_spec = pl.BlockSpec((1, H, WC), lambda n: (n, 0, 0))
    stats_spec = pl.BlockSpec((1, 2, WC), lambda n: (n, 0, 0))
    band_spec = pl.BlockSpec((3, WC, WC), lambda n: (0, 0, 0))
    vec_spec = pl.BlockSpec((1, WC), lambda n: (0, 0))
    pad_scr = pltpu.VMEM((H + 2, WC), jnp.bfloat16)

    # --- pass 1: conv1 + BN1 partial stats -----------------------------------
    conv1, stats1 = pl.pallas_call(
        _conv1_stats_kernel,
        grid=grid,
        in_specs=[samp_spec, band_spec],
        out_specs=(samp_spec, stats_spec),
        out_shape=(jax.ShapeDtypeStruct((N, H, WC), jnp.bfloat16),
                   jax.ShapeDtypeStruct((N, 2, WC), jnp.float32)),
        scratch_shapes=[pad_scr],
        compiler_params=cparams,
    )(x, params["w1"])

    scale1, shift1 = _bn_scale_shift_lanes(stats1, params["gamma1"],
                                           params["beta1"], count, W, C)

    # --- pass 2: BN1 + ReLU + conv2 + BN2 partial stats (fused) --------------
    conv2, stats2 = pl.pallas_call(
        _bn_relu_conv2_stats_kernel,
        grid=grid,
        in_specs=[samp_spec, vec_spec, vec_spec, band_spec],
        out_specs=(samp_spec, stats_spec),
        out_shape=(jax.ShapeDtypeStruct((N, H, WC), jnp.bfloat16),
                   jax.ShapeDtypeStruct((N, 2, WC), jnp.float32)),
        scratch_shapes=[pad_scr],
        compiler_params=cparams,
    )(conv1, scale1, shift1, params["w2"])

    scale2, shift2 = _bn_scale_shift_lanes(stats2, params["gamma2"],
                                           params["beta2"], count, W, C)

    # --- pass 3: BN2 + residual add + ReLU ------------------------------------
    out_p = pl.pallas_call(
        _bn_add_relu_kernel,
        grid=grid,
        in_specs=[samp_spec, vec_spec, vec_spec, samp_spec],
        out_specs=samp_spec,
        out_shape=jax.ShapeDtypeStruct((N, H, WC), jnp.float32),
        compiler_params=cparams,
    )(conv2, scale2, shift2, x)

    # (N, H, W*C) -> NHWC -> NCHW (no channel padding to slice away).
    return jnp.transpose(out_p.reshape(N, H, W, C), (0, 3, 1, 2))


# ----------------------------------------------------------------------------
# Pure-JAX reference (independent formulation) for a correctness sanity check.
# ----------------------------------------------------------------------------
def _reference_forward(x_nchw, raw):
    x = jnp.transpose(x_nchw, (0, 2, 3, 1)).astype(jnp.float32)   # NHWC

    def conv_bn(inp, w_oihw, gamma, beta):
        w = jnp.transpose(w_oihw, (2, 3, 1, 0))                    # HWIO
        out = jax.lax.conv_general_dilated(
            inp.astype(jnp.bfloat16), w.astype(jnp.bfloat16),
            window_strides=(1, 1), padding=((1, 1), (1, 1)),
            dimension_numbers=("NHWC", "HWIO", "NHWC"),
            preferred_element_type=jnp.float32)
        mean = out.mean(axis=(0, 1, 2))
        var = ((out - mean) ** 2).mean(axis=(0, 1, 2))             # biased
        return (out - mean) * jax.lax.rsqrt(var + _EPS) * gamma + beta

    y = jnp.maximum(conv_bn(x, raw["w1"], raw["gamma1"], raw["beta1"]), 0.0)
    out = jnp.maximum(conv_bn(y, raw["w2"], raw["gamma2"], raw["beta2"]) + x,
                      0.0)
    return jnp.transpose(out, (0, 3, 1, 2))


if __name__ == "__main__":
    key = jax.random.PRNGKey(0)
    kx, kp = jax.random.split(key)
    # downsample=None => Cin == Cout; W * C must equal 128 for lane packing.
    B, inplanes, planes, H, W = 2, 8, 8, 16, 16
    x = jax.random.normal(kx, (B, inplanes, H, W), jnp.float32)   # NCHW like torch
    raw = init_basic_block_params(kp, inplanes, planes)
    params = pack_params(raw, width=W)

    fwd = jax.jit(basic_block_forward)
    out = fwd(x, params)
    jax.block_until_ready(out)

    assert out.shape == (B, planes, H, W)
    assert bool(jnp.all(out >= 0.0))                      # final ReLU
    ref = _reference_forward(x, raw)
    # bf16 MXU operands + bf16 lane-dense HBM intermediates (f32 everywhere else).
    assert bool(jnp.max(jnp.abs(out - ref)) < 3e-2)
    print("KERNEL_OK")
</pallas_src>

<mosaic_0001>
module attributes {stable_mosaic.version = 11 : i64} {
  func.func @_conv1_stats_kernel(%arg0: i32, %arg1: memref<1x16x128xf32, #tpu.memory_space<vmem>>, %arg2: memref<3x128x128xbf16, #tpu.memory_space<vmem>>, %arg3: memref<1x16x128xbf16, #tpu.memory_space<vmem>>, %arg4: memref<1x2x128xf32, #tpu.memory_space<vmem>>, %arg5: memref<18x128xbf16, #tpu.memory_space<vmem>>) attributes {dimension_semantics = [#tpu.dimension_semantics<parallel>], iteration_bounds = array<i64: 2>, scalar_prefetch = 0 : i64, scratch_operands = 1 : i64, tpu.core_type = #tpu.core_type<tc>, window_params = [{transform_indices = @transform_0, window_bounds = array<i64: 1, 16, 128>}, {pipeline_mode = #tpu.pipeline_mode<synchronous>, transform_indices = @transform_1, window_bounds = array<i64: 3, 128, 128>}, {transform_indices = @transform_2, window_bounds = array<i64: 1, 16, 128>}, {transform_indices = @transform_3, window_bounds = array<i64: 1, 2, 128>}]} {
    %c0 = arith.constant 0 : index
    %c0_0 = arith.constant 0 : index
    %c0_1 = arith.constant 0 : index
    %0 = vector.load %arg1[%c0, %c0_0, %c0_1] : memref<1x16x128xf32, #tpu.memory_space<vmem>>, vector<1x16x128xf32>
    %1 = vector.shape_cast %0 : vector<1x16x128xf32> to vector<16x128xf32>
    %cst = arith.constant 0.000000e+00 : bf16
    %2 = vector.broadcast %cst : bf16 to vector<1x128xbf16>
    %c0_2 = arith.constant 0 : index
    %c0_3 = arith.constant 0 : index
    %3 = vector.load %arg5[%c0_2, %c0_3] : memref<18x128xbf16, #tpu.memory_space<vmem>>, vector<1x128xbf16>
    tpu.vector_store %arg5[%c0_2, %c0_3], %2 {strides = array<i32>} : memref<18x128xbf16, #tpu.memory_space<vmem>>, vector<1x128xbf16>,
    %c17 = arith.constant 17 : index
    %c0_4 = arith.constant 0 : index
    %4 = vector.load %arg5[%c17, %c0_4] : memref<18x128xbf16, #tpu.memory_space<vmem>>, vector<1x128xbf16>
    tpu.vector_store %arg5[%c17, %c0_4], %2 {strides = array<i32>} : memref<18x128xbf16, #tpu.memory_space<vmem>>, vector<1x128xbf16>,
    %5 = arith.truncf %1 : vector<16x128xf32> to vector<16x128xbf16>
    %c1 = arith.constant 1 : index
    %c0_5 = arith.constant 0 : index
    %6 = vector.load %arg5[%c1, %c0_5] : memref<18x128xbf16, #tpu.memory_space<vmem>>, vector<16x128xbf16>
    tpu.vector_store %arg5[%c1, %c0_5], %5 {strides = array<i32>} : memref<18x128xbf16, #tpu.memory_space<vmem>>, vector<16x128xbf16>,
    %cst_6 = arith.constant 0.000000e+00 : f32
    %7 = vector.broadcast %cst_6 : f32 to vector<16x128xf32>
    %c0_7 = arith.constant 0 : index
    %c0_8 = arith.constant 0 : index
    %8 = vector.load %arg5[%c0_7, %c0_8] : memref<18x128xbf16, #tpu.memory_space<vmem>>, vector<16x128xbf16>
    %c0_9 = arith.constant 0 : index
    %c0_10 = arith.constant 0 : index
    %c0_11 = arith.constant 0 : index
    %9 = vector.load %arg2[%c0_9, %c0_10, %c0_11] : memref<3x128x128xbf16, #tpu.memory_space<vmem>>, vector<1x128x128xbf16>
    %10 = vector.shape_cast %9 : vector<1x128x128xbf16> to vector<128x128xbf16>
    %cst_12 = arith.constant dense<0.000000e+00> : vector<16x128xf32>
    %11 = tpu.matmul %8, %10, %cst_12 {dimension_numbers = #tpu.dot_dimension_numbers<[1], [0], [0], [1], [0, 0, 1, 1], [], []>} : vector<16x128xbf16>, vector<128x128xbf16>, vector<16x128xf32> -> vector<16x128xf32>
    %12 = arith.addf %7, %11 : vector<16x128xf32>
    %c1_13 = arith.constant 1 : index
    %c0_14 = arith.constant 0 : index
    %13 = vector.load %arg5[%c1_13, %c0_14] : memref<18x128xbf16, #tpu.memory_space<vmem>>, vector<16x128xbf16>
    %c1_15 = arith.constant 1 : index
    %c0_16 = arith.constant 0 : index
    %c0_17 = arith.constant 0 : index
    %14 = vector.load %arg2[%c1_15, %c0_16, %c0_17] : memref<3x128x128xbf16, #tpu.memory_space<vmem>>, vector<1x128x128xbf16>
    %15 = vector.shape_cast %14 : vector<1x128x128xbf16> to vector<128x128xbf16>
    %cst_18 = arith.constant dense<0.000000e+00> : vector<16x128xf32>
    %16 = tpu.matmul %13, %15, %cst_18 {dimension_numbers = #tpu.dot_dimension_numbers<[1], [0], [0], [1], [0, 0, 1, 1], [], []>} : vector<16x128xbf16>, vector<128x128xbf16>, vector<16x128xf32> -> vector<16x128xf32>
    %17 = arith.addf %12, %16 : vector<16x128xf32>
    %c2 = arith.constant 2 : index
    %c0_19 = arith.constant 0 : index
    %18 = vector.load %arg5[%c2, %c0_19] : memref<18x128xbf16, #tpu.memory_space<vmem>>, vector<16x128xbf16>
    %c2_20 = arith.constant 2 : index
    %c0_21 = arith.constant 0 : index
    %c0_22 = arith.constant 0 : index
    %19 = vector.load %arg2[%c2_20, %c0_21, %c0_22] : memref<3x128x128xbf16, #tpu.memory_space<vmem>>, vector<1x128x128xbf16>
    %20 = vector.shape_cast %19 : vector<1x128x128xbf16> to vector<128x128xbf16>
    %cst_23 = arith.constant dense<0.000000e+00> : vector<16x128xf32>
    %21 = tpu.matmul %18, %20, %cst_23 {dimension_numbers = #tpu.dot_dimension_numbers<[1], [0], [0], [1], [0, 0, 1, 1], [], []>} : vector<16x128xbf16>, vector<128x128xbf16>, vector<16x128xf32> -> vector<16x128xf32>
    %22 = arith.addf %17, %21 : vector<16x128xf32>
    %23 = arith.truncf %22 : vector<16x128xf32> to vector<16x128xbf16>
    %c0_24 = arith.constant 0 : index
    %c0_25 = arith.constant 0 : index
    %c0_26 = arith.constant 0 : index
    %24 = vector.load %arg3[%c0_24, %c0_25, %c0_26] : memref<1x16x128xbf16, #tpu.memory_space<vmem>>, vector<1x16x128xbf16>
    %25 = vector.shape_cast %24 : vector<1x16x128xbf16> to vector<16x128xbf16>
    %26 = vector.shape_cast %23 : vector<16x128xbf16> to vector<1x16x128xbf16>
    tpu.vector_store %arg3[%c0_24, %c0_25, %c0_26], %26 {strides = array<i32>} : memref<1x16x128xbf16, #tpu.memory_space<vmem>>, vector<1x16x128xbf16>,
    %cst_27 = arith.constant dense<0.000000e+00> : vector<128xf32>
    %27 = vector.multi_reduction <add>, %22, %cst_27 [0] : vector<16x128xf32> to vector<128xf32>
    %28 = vector.shape_cast %27 : vector<128xf32> to vector<1x128xf32>
    %29 = arith.mulf %22, %22 : vector<16x128xf32>
    %cst_28 = arith.constant dense<0.000000e+00> : vector<128xf32>
    %30 = vector.multi_reduction <add>, %29, %cst_28 [0] : vector<16x128xf32> to vector<128xf32>
    %31 = vector.shape_cast %30 : vector<128xf32> to vector<1x128xf32>
    %32 = tpu.concatenate %28, %31 in 0 : vector<1x128xf32>, vector<1x128xf32> -> vector<2x128xf32>
    %c0_29 = arith.constant 0 : index
    %c0_30 = arith.constant 0 : index
    %c0_31 = arith.constant 0 : index
    %33 = vector.load %arg4[%c0_29, %c0_30, %c0_31] : memref<1x2x128xf32, #tpu.memory_space<vmem>>, vector<1x2x128xf32>
    %34 = vector.shape_cast %33 : vector<1x2x128xf32> to vector<2x128xf32>
    %35 = vector.shape_cast %32 : vector<2x128xf32> to vector<1x2x128xf32>
    tpu.vector_store %arg4[%c0_29, %c0_30, %c0_31], %35 {strides = array<i32>} : memref<1x2x128xf32, #tpu.memory_space<vmem>>, vector<1x2x128xf32>,
    return
  }
  func.func @transform_0(%arg0: i32) -> (i32, i32, i32) {
    %c0_i32 = arith.constant 0 : i32
    %c0_i32_0 = arith.constant 0 : i32
    %c0_i32_1 = arith.constant 0 : i32
    return %arg0, %c0_i32, %c0_i32_0 : i32, i32, i32
  }
  func.func @transform_1(%arg0: i32) -> (i32, i32, i32) {
    %c0_i32 = arith.constant 0 : i32
    %c0_i32_0 = arith.constant 0 : i32
    %c0_i32_1 = arith.constant 0 : i32
    %c0_i32_2 = arith.constant 0 : i32
    return %c0_i32, %c0_i32_0, %c0_i32_1 : i32, i32, i32
  }
  func.func @transform_2(%arg0: i32) -> (i32, i32, i32) {
    %c0_i32 = arith.constant 0 : i32
    %c0_i32_0 = arith.constant 0 : i32
    %c0_i32_1 = arith.constant 0 : i32
    return %arg0, %c0_i32, %c0_i32_0 : i32, i32, i32
  }
  func.func @transform_3(%arg0: i32) -> (i32, i32, i32) {
    %c0_i32 = arith.constant 0 : i32
    %c0_i32_0 = arith.constant 0 : i32
    %c0_i32_1 = arith.constant 0 : i32
    return %arg0, %c0_i32, %c0_i32_0 : i32, i32, i32
  }
}

module attributes {stable_mosaic.version = 11 : i64} {
  func.func @_bn_add_relu_kernel(%arg0: i32, %arg1: memref<1x16x128xbf16, #tpu.memory_space<vmem>>, %arg2: memref<1x128xf32, #tpu.memory_space<vmem>>, %arg3: memref<1x128xf32, #tpu.memory_space<vmem>>, %arg4: memref<1x16x128xf32, #tpu.memory_space<vmem>>, %arg5: memref<1x16x128xf32, #tpu.memory_space<vmem>>) attributes {dimension_semantics = [#tpu.dimension_semantics<parallel>], iteration_bounds = array<i64: 2>, scalar_prefetch = 0 : i64, scratch_operands = 0 : i64, tpu.core_type = #tpu.core_type<tc>, window_params = [{transform_indices = @transform_0, window_bounds = array<i64: 1, 16, 128>}, {pipeline_mode = #tpu.pipeline_mode<synchronous>, transform_indices = @transform_1, window_bounds = array<i64: 1, 128>}, {pipeline_mode = #tpu.pipeline_mode<synchronous>, transform_indices = @transform_2, window_bounds = array<i64: 1, 128>}, {transform_indices = @transform_3, window_bounds = array<i64: 1, 16, 128>}, {transform_indices = @transform_4, window_bounds = array<i64: 1, 16, 128>}]} {
    %c0 = arith.constant 0 : index
    %c0_0 = arith.constant 0 : index
    %c0_1 = arith.constant 0 : index
    %0 = vector.load %arg1[%c0, %c0_0, %c0_1] : memref<1x16x128xbf16, #tpu.memory_space<vmem>>, vector<1x16x128xbf16>
    %1 = vector.shape_cast %0 : vector<1x16x128xbf16> to vector<16x128xbf16>
    %2 = arith.extf %1 : vector<16x128xbf16> to vector<16x128xf32>
    %c0_2 = arith.constant 0 : index
    %c0_3 = arith.constant 0 : index
    %3 = vector.load %arg2[%c0_2, %c0_3] : memref<1x128xf32, #tpu.memory_space<vmem>>, vector<1x128xf32>
    %4 = vector.broadcast %3 : vector<1x128xf32> to vector<16x128xf32>
    %5 = arith.mulf %2, %4 : vector<16x128xf32>
    %c0_4 = arith.constant 0 : index
    %c0_5 = arith.constant 0 : index
    %6 = vector.load %arg3[%c0_4, %c0_5] : memref<1x128xf32, #tpu.memory_space<vmem>>, vector<1x128xf32>
    %7 = vector.broadcast %6 : vector<1x128xf32> to vector<16x128xf32>
    %8 = arith.addf %5, %7 : vector<16x128xf32>
    %c0_6 = arith.constant 0 : index
    %c0_7 = arith.constant 0 : index
    %c0_8 = arith.constant 0 : index
    %9 = vector.load %arg4[%c0_6, %c0_7, %c0_8] : memref<1x16x128xf32, #tpu.memory_space<vmem>>, vector<1x16x128xf32>
    %10 = vector.shape_cast %9 : vector<1x16x128xf32> to vector<16x128xf32>
    %11 = arith.addf %8, %10 : vector<16x128xf32>
    %cst = arith.constant 0.000000e+00 : f32
    %12 = vector.broadcast %cst : f32 to vector<16x128xf32>
    %13 = arith.maximumf %11, %12 : vector<16x128xf32>
    %c0_9 = arith.constant 0 : index
    %c0_10 = arith.constant 0 : index
    %c0_11 = arith.constant 0 : index
    %14 = vector.load %arg5[%c0_9, %c0_10, %c0_11] : memref<1x16x128xf32, #tpu.memory_space<vmem>>, vector<1x16x128xf32>
    %15 = vector.shape_cast %14 : vector<1x16x128xf32> to vector<16x128xf32>
    %16 = vector.shape_cast %13 : vector<16x128xf32> to vector<1x16x128xf32>
    tpu.vector_store %arg5[%c0_9, %c0_10, %c0_11], %16 {strides = array<i32>} : memref<1x16x128xf32, #tpu.memory_space<vmem>>, vector<1x16x128xf32>,
    return
  }
  func.func @transform_0(%arg0: i32) -> (i32, i32, i32) {
    %c0_i32 = arith.constant 0 : i32
    %c0_i32_0 = arith.constant 0 : i32
    %c0_i32_1 = arith.constant 0 : i32
    return %arg0, %c0_i32, %c0_i32_0 : i32, i32, i32
  }
  func.func @transform_1(%arg0: i32) -> (i32, i32) {
    %c0_i32 = arith.constant 0 : i32
    %c0_i32_0 = arith.constant 0 : i32
    %c0_i32_1 = arith.constant 0 : i32
    return %c0_i32, %c0_i32_0 : i32, i32
  }
  func.func @transform_2(%arg0: i32) -> (i32, i32) {
    %c0_i32 = arith.constant 0 : i32
    %c0_i32_0 = arith.constant 0 : i32
    %c0_i32_1 = arith.constant 0 : i32
    return %c0_i32, %c0_i32_0 : i32, i32
  }
  func.func @transform_3(%arg0: i32) -> (i32, i32, i32) {
    %c0_i32 = arith.constant 0 : i32
    %c0_i32_0 = arith.constant 0 : i32
    %c0_i32_1 = arith.constant 0 : i32
    return %arg0, %c0_i32, %c0_i32_0 : i32, i32, i32
  }
  func.func @transform_4(%arg0: i32) -> (i32, i32, i32) {
    %c0_i32 = arith.constant 0 : i32
    %c0_i32_0 = arith.constant 0 : i32
    %c0_i32_1 = arith.constant 0 : i32
    return %arg0, %c0_i32, %c0_i32_0 : i32, i32, i32
  }
}

module attributes {stable_mosaic.version = 11 : i64} {
  func.func @_bn_relu_conv2_stats_kernel(%arg0: i32, %arg1: memref<1x16x128xbf16, #tpu.memory_space<vmem>>, %arg2: memref<1x128xf32, #tpu.memory_space<vmem>>, %arg3: memref<1x128xf32, #tpu.memory_space<vmem>>, %arg4: memref<3x128x128xbf16, #tpu.memory_space<vmem>>, %arg5: memref<1x16x128xbf16, #tpu.memory_space<vmem>>, %arg6: memref<1x2x128xf32, #tpu.memory_space<vmem>>, %arg7: memref<18x128xbf16, #tpu.memory_space<vmem>>) attributes {dimension_semantics = [#tpu.dimension_semantics<parallel>], iteration_bounds = array<i64: 2>, scalar_prefetch = 0 : i64, scratch_operands = 1 : i64, tpu.core_type = #tpu.core_type<tc>, window_params = [{transform_indices = @transform_0, window_bounds = array<i64: 1, 16, 128>}, {pipeline_mode = #tpu.pipeline_mode<synchronous>, transform_indices = @transform_1, window_bounds = array<i64: 1, 128>}, {pipeline_mode = #tpu.pipeline_mode<synchronous>, transform_indices = @transform_2, window_bounds = array<i64: 1, 128>}, {pipeline_mode = #tpu.pipeline_mode<synchronous>, transform_indices = @transform_3, window_bounds = array<i64: 3, 128, 128>}, {transform_indices = @transform_4, window_bounds = array<i64: 1, 16, 128>}, {transform_indices = @transform_5, window_bounds = array<i64: 1, 2, 128>}]} {
    %c0 = arith.constant 0 : index
    %c0_0 = arith.constant 0 : index
    %c0_1 = arith.constant 0 : index
    %0 = vector.load %arg1[%c0, %c0_0, %c0_1] : memref<1x16x128xbf16, #tpu.memory_space<vmem>>, vector<1x16x128xbf16>
    %1 = vector.shape_cast %0 : vector<1x16x128xbf16> to vector<16x128xbf16>
    %2 = arith.extf %1 : vector<16x128xbf16> to vector<16x128xf32>
    %c0_2 = arith.constant 0 : index
    %c0_3 = arith.constant 0 : index
    %3 = vector.load %arg2[%c0_2, %c0_3] : memref<1x128xf32, #tpu.memory_space<vmem>>, vector<1x128xf32>
    %4 = vector.broadcast %3 : vector<1x128xf32> to vector<16x128xf32>
    %5 = arith.mulf %2, %4 : vector<16x128xf32>
    %c0_4 = arith.constant 0 : index
    %c0_5 = arith.constant 0 : index
    %6 = vector.load %arg3[%c0_4, %c0_5] : memref<1x128xf32, #tpu.memory_space<vmem>>, vector<1x128xf32>
    %7 = vector.broadcast %6 : vector<1x128xf32> to vector<16x128xf32>
    %8 = arith.addf %5, %7 : vector<16x128xf32>
    %cst = arith.constant 0.000000e+00 : f32
    %9 = vector.broadcast %cst : f32 to vector<16x128xf32>
    %10 = arith.maximumf %8, %9 : vector<16x128xf32>
    %cst_6 = arith.constant 0.000000e+00 : bf16
    %11 = vector.broadcast %cst_6 : bf16 to vector<1x128xbf16>
    %c0_7 = arith.constant 0 : index
    %c0_8 = arith.constant 0 : index
    %12 = vector.load %arg7[%c0_7, %c0_8] : memref<18x128xbf16, #tpu.memory_space<vmem>>, vector<1x128xbf16>
    tpu.vector_store %arg7[%c0_7, %c0_8], %11 {strides = array<i32>} : memref<18x128xbf16, #tpu.memory_space<vmem>>, vector<1x128xbf16>,
    %c17 = arith.constant 17 : index
    %c0_9 = arith.constant 0 : index
    %13 = vector.load %arg7[%c17, %c0_9] : memref<18x128xbf16, #tpu.memory_space<vmem>>, vector<1x128xbf16>
    tpu.vector_store %arg7[%c17, %c0_9], %11 {strides = array<i32>} : memref<18x128xbf16, #tpu.memory_space<vmem>>, vector<1x128xbf16>,
    %14 = arith.truncf %10 : vector<16x128xf32> to vector<16x128xbf16>
    %c1 = arith.constant 1 : index
    %c0_10 = arith.constant 0 : index
    %15 = vector.load %arg7[%c1, %c0_10] : memref<18x128xbf16, #tpu.memory_space<vmem>>, vector<16x128xbf16>
    tpu.vector_store %arg7[%c1, %c0_10], %14 {strides = array<i32>} : memref<18x128xbf16, #tpu.memory_space<vmem>>, vector<16x128xbf16>,
    %cst_11 = arith.constant 0.000000e+00 : f32
    %16 = vector.broadcast %cst_11 : f32 to vector<16x128xf32>
    %c0_12 = arith.constant 0 : index
    %c0_13 = arith.constant 0 : index
    %17 = vector.load %arg7[%c0_12, %c0_13] : memref<18x128xbf16, #tpu.memory_space<vmem>>, vector<16x128xbf16>
    %c0_14 = arith.constant 0 : index
    %c0_15 = arith.constant 0 : index
    %c0_16 = arith.constant 0 : index
    %18 = vector.load %arg4[%c0_14, %c0_15, %c0_16] : memref<3x128x128xbf16, #tpu.memory_space<vmem>>, vector<1x128x128xbf16>
    %19 = vector.shape_cast %18 : vector<1x128x128xbf16> to vector<128x128xbf16>
    %cst_17 = arith.constant dense<0.000000e+00> : vector<16x128xf32>
    %20 = tpu.matmul %17, %19, %cst_17 {dimension_numbers = #tpu.dot_dimension_numbers<[1], [0], [0], [1], [0, 0, 1, 1], [], []>} : vector<16x128xbf16>, vector<128x128xbf16>, vector<16x128xf32> -> vector<16x128xf32>
    %21 = arith.addf %16, %20 : vector<16x128xf32>
    %c1_18 = arith.constant 1 : index
    %c0_19 = arith.constant 0 : index
    %22 = vector.load %arg7[%c1_18, %c0_19] : memref<18x128xbf16, #tpu.memory_space<vmem>>, vector<16x128xbf16>
    %c1_20 = arith.constant 1 : index
    %c0_21 = arith.constant 0 : index
    %c0_22 = arith.constant 0 : index
    %23 = vector.load %arg4[%c1_20, %c0_21, %c0_22] : memref<3x128x128xbf16, #tpu.memory_space<vmem>>, vector<1x128x128xbf16>
    %24 = vector.shape_cast %23 : vector<1x128x128xbf16> to vector<128x128xbf16>
    %cst_23 = arith.constant dense<0.000000e+00> : vector<16x128xf32>
    %25 = tpu.matmul %22, %24, %cst_23 {dimension_numbers = #tpu.dot_dimension_numbers<[1], [0], [0], [1], [0, 0, 1, 1], [], []>} : vector<16x128xbf16>, vector<128x128xbf16>, vector<16x128xf32> -> vector<16x128xf32>
    %26 = arith.addf %21, %25 : vector<16x128xf32>
    %c2 = arith.constant 2 : index
    %c0_24 = arith.constant 0 : index
    %27 = vector.load %arg7[%c2, %c0_24] : memref<18x128xbf16, #tpu.memory_space<vmem>>, vector<16x128xbf16>
    %c2_25 = arith.constant 2 : index
    %c0_26 = arith.constant 0 : index
    %c0_27 = arith.constant 0 : index
    %28 = vector.load %arg4[%c2_25, %c0_26, %c0_27] : memref<3x128x128xbf16, #tpu.memory_space<vmem>>, vector<1x128x128xbf16>
    %29 = vector.shape_cast %28 : vector<1x128x128xbf16> to vector<128x128xbf16>
    %cst_28 = arith.constant dense<0.000000e+00> : vector<16x128xf32>
    %30 = tpu.matmul %27, %29, %cst_28 {dimension_numbers = #tpu.dot_dimension_numbers<[1], [0], [0], [1], [0, 0, 1, 1], [], []>} : vector<16x128xbf16>, vector<128x128xbf16>, vector<16x128xf32> -> vector<16x128xf32>
    %31 = arith.addf %26, %30 : vector<16x128xf32>
    %32 = arith.truncf %31 : vector<16x128xf32> to vector<16x128xbf16>
    %c0_29 = arith.constant 0 : index
    %c0_30 = arith.constant 0 : index
    %c0_31 = arith.constant 0 : index
    %33 = vector.load %arg5[%c0_29, %c0_30, %c0_31] : memref<1x16x128xbf16, #tpu.memory_space<vmem>>, vector<1x16x128xbf16>
    %34 = vector.shape_cast %33 : vector<1x16x128xbf16> to vector<16x128xbf16>
    %35 = vector.shape_cast %32 : vector<16x128xbf16> to vector<1x16x128xbf16>
    tpu.vector_store %arg5[%c0_29, %c0_30, %c0_31], %35 {strides = array<i32>} : memref<1x16x128xbf16, #tpu.memory_space<vmem>>, vector<1x16x128xbf16>,
    %cst_32 = arith.constant dense<0.000000e+00> : vector<128xf32>
    %36 = vector.multi_reduction <add>, %31, %cst_32 [0] : vector<16x128xf32> to vector<128xf32>
    %37 = vector.shape_cast %36 : vector<128xf32> to vector<1x128xf32>
    %38 = arith.mulf %31, %31 : vector<16x128xf32>
    %cst_33 = arith.constant dense<0.000000e+00> : vector<128xf32>
    %39 = vector.multi_reduction <add>, %38, %cst_33 [0] : vector<16x128xf32> to vector<128xf32>
    %40 = vector.shape_cast %39 : vector<128xf32> to vector<1x128xf32>
    %41 = tpu.concatenate %37, %40 in 0 : vector<1x128xf32>, vector<1x128xf32> -> vector<2x128xf32>
    %c0_34 = arith.constant 0 : index
    %c0_35 = arith.constant 0 : index
    %c0_36 = arith.constant 0 : index
    %42 = vector.load %arg6[%c0_34, %c0_35, %c0_36] : memref<1x2x128xf32, #tpu.memory_space<vmem>>, vector<1x2x128xf32>
    %43 = vector.shape_cast %42 : vector<1x2x128xf32> to vector<2x128xf32>
    %44 = vector.shape_cast %41 : vector<2x128xf32> to vector<1x2x128xf32>
    tpu.vector_store %arg6[%c0_34, %c0_35, %c0_36], %44 {strides = array<i32>} : memref<1x2x128xf32, #tpu.memory_space<vmem>>, vector<1x2x128xf32>,
    return
  }
  func.func @transform_0(%arg0: i32) -> (i32, i32, i32) {
    %c0_i32 = arith.constant 0 : i32
    %c0_i32_0 = arith.constant 0 : i32
    %c0_i32_1 = arith.constant 0 : i32
    return %arg0, %c0_i32, %c0_i32_0 : i32, i32, i32
  }
  func.func @transform_1(%arg0: i32) -> (i32, i32) {
    %c0_i32 = arith.constant 0 : i32
    %c0_i32_0 = arith.constant 0 : i32
    %c0_i32_1 = arith.constant 0 : i32
    return %c0_i32, %c0_i32_0 : i32, i32
  }
  func.func @transform_2(%arg0: i32) -> (i32, i32) {
    %c0_i32 = arith.constant 0 : i32
    %c0_i32_0 = arith.constant 0 : i32
    %c0_i32_1 = arith.constant 0 : i32
    return %c0_i32, %c0_i32_0 : i32, i32
  }
  func.func @transform_3(%arg0: i32) -> (i32, i32, i32) {
    %c0_i32 = arith.constant 0 : i32
    %c0_i32_0 = arith.constant 0 : i32
    %c0_i32_1 = arith.constant 0 : i32
    %c0_i32_2 = arith.constant 0 : i32
    return %c0_i32, %c0_i32_0, %c0_i32_1 : i32, i32, i32
  }
  func.func @transform_4(%arg0: i32) -> (i32, i32, i32) {
    %c0_i32 = arith.constant 0 : i32
    %c0_i32_0 = arith.constant 0 : i32
    %c0_i32_1 = arith.constant 0 : i32
    return %arg0, %c0_i32, %c0_i32_0 : i32, i32, i32
  }
  func.func @transform_5(%arg0: i32) -> (i32, i32, i32) {
    %c0_i32 = arith.constant 0 : i32
    %c0_i32_0 = arith.constant 0 : i32
    %c0_i32_1 = arith.constant 0 : i32
    return %arg0, %c0_i32, %c0_i32_0 : i32, i32, i32
  }
}

</mosaic_0001>

<llo_original>
// kernel: tile.28
$region0: #{tile.28}
  #allocation0 [shape = 's32[1]{0}', space=sflag, size = 0x4, scoped, tag = 'scoped memory for tile.28']
  %s0 = inlined_call_operand.vmem [shape: f32[8], index: 0, kind: input, shape index: {}]
  %s1 = inlined_call_operand.vmem [shape: f32[16,8], index: 1, kind: output, shape index: {}]
  // Predicated region
  $region2: #{tile.28} parent=0 // pred_check
    _
  $region3: #{tile.28} parent=0 // pred_check_branch
    %3 = sbr.rel (0) target = $region5
  $region4: #{tile.28} parent=0 // pred_region
    _
  $region5: #{tile.28} parent=0 // pred_fallthru
    _
  %v4 = vld [vmem:[%s0] ss:$0 sm:$0xff]
  %5 = vst [vmem:[%s1] sm:$0xff] %v4
  %s6 = scalar_lea.vmem %s1, 8
  %7 = vst [vmem:[%s6] sm:$0xff] %v4

// kernel: tile.29
$region0: #{tile.29}
  %s0 = inlined_call_operand.vmem [shape: f32[16,8], index: 0, kind: input, shape index: {}]
  %s1 = inlined_call_operand.vmem [shape: f32[1,128], index: 1, kind: output, shape index: {}]
  $region1: #{tile.29} parent=0
    #allocation0 [shape = 'u8[4096]{0}', space=vmem, size = 0x1000, scoped, tag = 'scoped mem for output reshape']
    %v2 = vld [vmem:[%s0] sm:$0x1]
    %vm3 = vcmask 64512
    %4 = vst.msk [vmem:[#allocation0] sm:$0x1] %vm3, %v2
    %s5 = scalar_lea.vmem %s0, 15
    %v6 = vld [vmem:[%s5] sm:$0x1]
    %7 = vrot.lane.b32.xlu0 %v6, 120
    %v8 = vpop.permute.xlu0 %7
    %vm9 = vcmask 1048512
    %10 = vst.msk [vmem:[#allocation0] sm:$0x1] %vm9, %v8
    %s11 = scalar_lea.vmem %s0, 14
    %v12 = vld [vmem:[%s11] sm:$0x1]
    %13 = vrot.lane.b32.xlu0 %v12, 112
    %v14 = vpop.permute.xlu0 %13
    %vm15 = vcmask 982912
    %16 = vst.msk [vmem:[#allocation0] sm:$0x1] %vm15, %v14
    %s17 = scalar_lea.vmem %s0, 13
    %v18 = vld [vmem:[%s17] sm:$0x1]
    %19 = vrot.lane.b32.xlu0 %v18, 104
    %v20 = vpop.permute.xlu0 %19
    %vm21 = vcmask 917312
    %22 = vst.msk [vmem:[#allocation0] sm:$0x1] %vm21, %v20
    %s23 = scalar_lea.vmem %s0, 12
    %v24 = vld [vmem:[%s23] sm:$0x1]
    %25 = vrot.lane.b32.xlu0 %v24, 96
    %v26 = vpop.permute.xlu0 %25
    %vm27 = vcmask 851712
    %28 = vst.msk [vmem:[#allocation0] sm:$0x1] %vm27, %v26
    %s29 = scalar_lea.vmem %s0, 11
    %v30 = vld [vmem:[%s29] sm:$0x1]
    %31 = vrot.lane.b32.xlu0 %v30, 88
    %v32 = vpop.permute.xlu0 %31
    %vm33 = vcmask 786112
    %34 = vst.msk [vmem:[#allocation0] sm:$0x1] %vm33, %v32
    %s35 = scalar_lea.vmem %s0, 10
    %v36 = vld [vmem:[%s35] sm:$0x1]
    %37 = vrot.lane.b32.xlu0 %v36, 80
    %v38 = vpop.permute.xlu0 %37
    %vm39 = vcmask 720512
    %40 = vst.msk [vmem:[#allocation0] sm:$0x1] %vm39, %v38
    %s41 = scalar_lea.vmem %s0, 9
    %v42 = vld [vmem:[%s41] sm:$0x1]
    %43 = vrot.lane.b32.xlu0 %v42, 72
    %v44 = vpop.permute.xlu0 %43
    %vm45 = vcmask 654912
    %46 = vst.msk [vmem:[#allocation0] sm:$0x1] %vm45, %v44
    %s47 = scalar_lea.vmem %s0, 8
    %v48 = vld [vmem:[%s47] sm:$0x1]
    %49 = vrot.lane.b32.xlu0 %v48, 64
    %v50 = vpop.permute.xlu0 %49
    %vm51 = vcmask 589312
    %52 = vst.msk [vmem:[#allocation0] sm:$0x1] %vm51, %v50
    %s53 = scalar_lea.vmem %s0, 7
    %v54 = vld [vmem:[%s53] sm:$0x1]
    %55 = vrot.lane.b32.xlu0 %v54, 56
    %v56 = vpop.permute.xlu0 %55
    %vm57 = vcmask 523712
    %58 = vst.msk [vmem:[#allocation0] sm:$0x1] %vm57, %v56
    %s59 = scalar_lea.vmem %s0, 6
    %v60 = vld [vmem:[%s59] sm:$0x1]
    %61 = vrot.lane.b32.xlu0 %v60, 48
    %v62 = vpop.permute.xlu0 %61
    %vm63 = vcmask 458112
    %64 = vst.msk [vmem:[#allocation0] sm:$0x1] %vm63, %v62
    %s65 = scalar_lea.vmem %s0, 5
    %v66 = vld [vmem:[%s65] sm:$0x1]
    %67 = vrot.lane.b32.xlu0 %v66, 40
    %v68 = vpop.permute.xlu0 %67
    %vm69 = vcmask 392512
    %70 = vst.msk [vmem:[#allocation0] sm:$0x1] %vm69, %v68
    %s71 = scalar_lea.vmem %s0, 4
    %v72 = vld [vmem:[%s71] sm:$0x1]
    %73 = vrot.lane.b32.xlu0 %v72, 32
    %v74 = vpop.permute.xlu0 %73
    %vm75 = vcmask 326912
    %76 = vst.msk [vmem:[#allocation0] sm:$0x1] %vm75, %v74
    %s77 = scalar_lea.vmem %s0, 3
    %v78 = vld [vmem:[%s77] sm:$0x1]
    %79 = vrot.lane.b32.xlu0 %v78, 24
    %v80 = vpop.permute.xlu0 %79
    %vm81 = vcmask 261312
    %82 = vst.msk [vmem:[#allocation0] sm:$0x1] %vm81, %v80
    %s83 = scalar_lea.vmem %s0, 2
    %v84 = vld [vmem:[%s83] sm:$0x1]
    %85 = vrot.lane.b32.xlu0 %v84, 16
    %v86 = vpop.permute.xlu0 %85
    %vm87 = vcmask 195712
    %88 = vst.msk [vmem:[#allocation0] sm:$0x1] %vm87, %v86
    %s89 = scalar_lea.vmem %s0, 1
    %v90 = vld [vmem:[%s89] sm:$0x1]
    %91 = vrot.lane.b32.xlu0 %v90, 8
    %v92 = vpop.permute.xlu0 %91
    %vm93 = vcmask 130112
    %94 = vst.msk [vmem:[#allocation0] sm:$0x1] %vm93, %v92
    %s96 = sshll.u32 1, 1
    %s97 = ssub.s32 %s96, 1
    %v99 = vld [vmem:[#allocation0] sm:%s97]
    %s100 = sshll.u32 1, 1
    %s101 = ssub.s32 %s100, 1
    %102 = vst [vmem:[%s1] sm:%s101] %v99

// kernel: basic_block_forward.5
$region0: #{basic_block_forward.5}
  #allocation0 [shape = 'u32[]', space=smem, size = 0x4, offset = 0x4, fixed_abs, tag = 'smem constant byte address 0x4 - core index']
  #allocation1 [shape = 'u32[144,128]{1,0:T(1,128)}', space=vmem, size = 0x12000, scoped, tag = 'internal scratch']
  %s0 = inlined_call_operand.vmem [shape: bf16[2,16,128], index: 0, kind: input, shape index: {}]
  %s1 = inlined_call_operand.vmem [shape: f32[1,128], index: 1, kind: input, shape index: {}]
  %s2 = inlined_call_operand.vmem [shape: f32[1,128], index: 2, kind: input, shape index: {}]
  %s3 = inlined_call_operand.vmem [shape: f32[2,16,128], index: 3, kind: input, shape index: {}]
  %s4 = inlined_call_operand.vmem [shape: f32[2,16,128], index: 4, kind: output, shape index: {}]
  %s5 = sld [smem:[#allocation0]]
  $region49: #{basic_block_forward.5} parent=0
    _
  %s7 = ssub.s32 1, %s5
  %s8 = scalar_select 0, %s7, %s5
  loop: start=0, step=1, limit=4
  $region2: #{basic_block_forward.5} parent=0 // loop_pre_header
    _
  $region3: #{basic_block_forward.5} parent=0 // loop_header
    %s10 = sphi 0, %s14
    %p11 = scmp.ge.s32.totalorder %s10, 4
    %s20 = sphi 0, %s22
    %s23 = sphi 0, %s20
    %s24 = sphi 0, %s23
    %s40 = sphi 0, %s24
    %s44 = sphi 0, %s44
    %s46 = sphi 0, %s44
    %s47 = sphi 0, %s46
    %s61 = sphi 0, %s47
    %s65 = sphi 0, %s65
    %s67 = sphi 0, %s65
    %s68 = sphi 0, %s67
    %s82 = sphi 0, %s68
    %s88 = sphi 0, %s90
    %s91 = sphi 0, %s88
    %s92 = sphi 0, %s91
    %s108 = sphi 0, %s92
    %s114 = sphi 0, %s116
    %s117 = sphi 0, %s114
    %s118 = sphi 0, %s117
    %s134 = sphi 0, %s118
  $region4: #{basic_block_forward.5} parent=0 // loop_header_branch
    %13 = sbr.rel (%p11) target = $region8
  $region5: #{basic_block_forward.5} parent=0 // loop_body
    %s15 = ssub.s32 %s10, 1
    %s16 = ssub.s32 %s10, 2
    %s17 = sadd.s32 %s10, 1
    %s18 = ssub.s32 %s10, %s17
    %p19 = scmp.eq.s32.totalorder %s18, 0
    %s21 = sadd.s32 %s20, 1
    %s22 = scalar_select %p19, %s20, %s21
    %p25 = pneg %p19
    %p26 = scmp.eq.s32.totalorder %s10, 1
    %p27 = por %p25, %p26
    %p28 = scmp.ne.s32.totalorder %s20, %s23
    %p29 = scmp.eq.s32.totalorder %s10, 0
    %p30 = por %p28, %p29
    %p31 = scmp.ne.s32.totalorder %s20, %s23
    %p32 = scmp.eq.s32.totalorder %s15, 1
    %p33 = por %p31, %p32
    %p34 = scmp.ne.s32.totalorder %s23, %s24
    %p35 = scmp.eq.s32.totalorder %s15, 0
    %p36 = por %p34, %p35
    %p37 = scmp.ne.s32.totalorder %s23, %s24
    %p38 = scmp.eq.s32.totalorder %s16, 1
    %p39 = por %p37, %p38
    %p41 = scmp.ne.s32.totalorder %s24, %s40
    %p42 = scmp.eq.s32.totalorder %s16, 0
    %p43 = por %p41, %p42
    %s45 = sadd.s32 %s44, 1
    %p48 = scmp.eq.s32.totalorder %s10, 1
    %p49 = scmp.ne.s32.totalorder %s44, %s46
    %p50 = scmp.eq.s32.totalorder %s10, 0
    %p51 = por %p49, %p50
    %p52 = scmp.ne.s32.totalorder %s44, %s46
    %p53 = scmp.eq.s32.totalorder %s15, 1
    %p54 = por %p52, %p53
    %p55 = scmp.ne.s32.totalorder %s46, %s47
    %p56 = scmp.eq.s32.totalorder %s15, 0
    %p57 = por %p55, %p56
    %p58 = scmp.ne.s32.totalorder %s46, %s47
    %p59 = scmp.eq.s32.totalorder %s16, 1
    %p60 = por %p58, %p59
    %p62 = scmp.ne.s32.totalorder %s47, %s61
    %p63 = scmp.eq.s32.totalorder %s16, 0
    %p64 = por %p62, %p63
    %s66 = sadd.s32 %s65, 1
    %p69 = scmp.eq.s32.totalorder %s10, 1
    %p70 = scmp.ne.s32.totalorder %s65, %s67
    %p71 = scmp.eq.s32.totalorder %s10, 0
    %p72 = por %p70, %p71
    %p73 = scmp.ne.s32.totalorder %s65, %s67
    %p74 = scmp.eq.s32.totalorder %s15, 1
    %p75 = por %p73, %p74
    %p76 = scmp.ne.s32.totalorder %s67, %s68
    %p77 = scmp.eq.s32.totalorder %s15, 0
    %p78 = por %p76, %p77
    %p79 = scmp.ne.s32.totalorder %s67, %s68
    %p80 = scmp.eq.s32.totalorder %s16, 1
    %p81 = por %p79, %p80
    %p83 = scmp.ne.s32.totalorder %s68, %s82
    %p84 = scmp.eq.s32.totalorder %s16, 0
    %p85 = por %p83, %p84
    %s86 = ssub.s32 %s10, %s17
    %p87 = scmp.eq.s32.totalorder %s86, 0
    %s89 = sadd.s32 %s88, 1
    %s90 = scalar_select %p87, %s88, %s89
    %p93 = pneg %p87
    %p94 = scmp.eq.s32.totalorder %s10, 1
    %p95 = por %p93, %p94
    %p96 = scmp.ne.s32.totalorder %s88, %s91
    %p97 = scmp.eq.s32.totalorder %s10, 0
    %p98 = por %p96, %p97
    %p99 = scmp.ne.s32.totalorder %s88, %s91
    %p100 = scmp.eq.s32.totalorder %s15, 1
    %p101 = por %p99, %p100
    %p102 = scmp.ne.s32.totalorder %s91, %s92
    %p103 = scmp.eq.s32.totalorder %s15, 0
    %p104 = por %p102, %p103
    %p105 = scmp.ne.s32.totalorder %s91, %s92
    %p106 = scmp.eq.s32.totalorder %s16, 1
    %p107 = por %p105, %p106
    %p109 = scmp.ne.s32.totalorder %s92, %s108
    %p110 = scmp.eq.s32.totalorder %s16, 0
    %p111 = por %p109, %p110
    %s112 = ssub.s32 %s10, %s17
    %p113 = scmp.eq.s32.totalorder %s112, 0
    %s115 = sadd.s32 %s114, 1
    %s116 = scalar_select %p113, %s114, %s115
    %p119 = pneg %p113
    %p120 = scmp.eq.s32.totalorder %s10, 1
    %p121 = por %p119, %p120
    %p122 = scmp.ne.s32.totalorder %s114, %s117
    %p123 = scmp.eq.s32.totalorder %s10, 0
    %p124 = por %p122, %p123
    %p125 = scmp.ne.s32.totalorder %s114, %s117
    %p126 = scmp.eq.s32.totalorder %s15, 1
    %p127 = por %p125, %p126
    %p128 = scmp.ne.s32.totalorder %s117, %s118
    %p129 = scmp.eq.s32.totalorder %s15, 0
    %p130 = por %p128, %p129
    %p131 = scmp.ne.s32.totalorder %s117, %s118
    %p132 = scmp.eq.s32.totalorder %s16, 1
    %p133 = por %p131, %p132
    %p135 = scmp.ne.s32.totalorder %s118, %s134
    %p136 = scmp.eq.s32.totalorder %s16, 0
    %p137 = por %p135, %p136
    %p138 = scmp.le.s32.totalorder 1, %s10
    %p139 = scmp.lt.s32.totalorder %s10, 3
    %p140 = pnand %p138, %p139
    %p141 = pneg %p140
    // Predicated region
    $region9: #{basic_block_forward.5} parent=5 // pred_check
      _
    $region10: #{basic_block_forward.5} parent=5 // pred_check_branch
      %143 = sbr.rel (%p140) target = $region12
    $region11: #{basic_block_forward.5} parent=5 // pred_region
      %s144 = ssub.s32 %s10, 1
      // Predicated region
      $region13: #{basic_block_forward.5} parent=11 // pred_check
        %p145 = pneg %p57
      $region14: #{basic_block_forward.5} parent=11 // pred_check_branch
        %147 = sbr.rel (%p145) target = $region16
      $region15: #{basic_block_forward.5} parent=11 // pred_region
        _
      $region16: #{basic_block_forward.5} parent=11 // pred_fallthru
        _
      // Predicated region
      $region17: #{basic_block_forward.5} parent=11 // pred_check
        %p148 = pneg %p78
      $region18: #{basic_block_forward.5} parent=11 // pred_check_branch
        %150 = sbr.rel (%p148) target = $region20
      $region19: #{basic_block_forward.5} parent=11 // pred_region
        _
      $region20: #{basic_block_forward.5} parent=11 // pred_fallthru
        _
    $region12: #{basic_block_forward.5} parent=5 // pred_fallthru
      _
    %p151 = scmp.lt.s32.totalorder %s10, 2
    // Predicated region
    $region21: #{basic_block_forward.5} parent=5 // pred_check
      %p152 = pneg %p151
    $region22: #{basic_block_forward.5} parent=5 // pred_check_branch
      %154 = sbr.rel (%p152) target = $region24
    $region23: #{basic_block_forward.5} parent=5 // pred_region
      // Predicated region
      $region25: #{basic_block_forward.5} parent=23 // pred_check
        %p155 = pneg %p30
      $region26: #{basic_block_forward.5} parent=23 // pred_check_branch
        %157 = sbr.rel (%p155) target = $region28
      $region27: #{basic_block_forward.5} parent=23 // pred_region
        %p158 = scmp.lt.s32.totalorder %s10, 1
        %s159 = scalar_select %p158, %s10, 1
        %s160 = smul.addr %s159, 2
        %s161 = smul.addr %s160, 4
        %s162 = scalar_lea.vmem %s0, %s161
      $region28: #{basic_block_forward.5} parent=23 // pred_fallthru
        _
      // Predicated region
      $region29: #{basic_block_forward.5} parent=23 // pred_check
        %p163 = pneg %p98
      $region30: #{basic_block_forward.5} parent=23 // pred_check_branch
        %165 = sbr.rel (%p163) target = $region32
      $region31: #{basic_block_forward.5} parent=23 // pred_region
        %p166 = scmp.lt.s32.totalorder %s10, 1
        %s167 = scalar_select %p166, %s10, 1
        %s168 = smul.addr %s167, 2
        %s169 = smul.addr %s168, 8
        %s170 = scalar_lea.vmem %s3, %s169
      $region32: #{basic_block_forward.5} parent=23 // pred_fallthru
        _
    $region24: #{basic_block_forward.5} parent=5 // pred_fallthru
      _
    %p171 = scmp.le.s32.totalorder 1, %s10
    %p172 = scmp.lt.s32.totalorder %s10, 3
    %p173 = pnand %p171, %p172
    %p174 = pneg %p173
    // Predicated region
    $region33: #{basic_block_forward.5} parent=5 // pred_check
      _
    $region34: #{basic_block_forward.5} parent=5 // pred_check_branch
      %176 = sbr.rel (%p173) target = $region36
    $region35: #{basic_block_forward.5} parent=5 // pred_region
      %s177 = ssub.s32 %s10, 1
      %p178 = scmp.lt.s32.totalorder %s15, 1
      %s179 = scalar_select %p178, %s15, 1
      %s180 = smul.addr %s179, 2
      %s181 = smul.addr %s180, 4
      %s182 = scalar_lea.vmem %s0, %s181
      %p183 = pneg %p36
      %p184 = pneg %p33
      %p185 = pneg %p57
      %p186 = pneg %p54
      %p187 = pneg %p78
      %p188 = pneg %p75
      %p189 = scmp.lt.s32.totalorder %s15, 1
      %s190 = scalar_select %p189, %s15, 1
      %s191 = smul.addr %s190, 2
      %s192 = smul.addr %s191, 8
      %s193 = scalar_lea.vmem %s3, %s192
      %p194 = pneg %p104
      %p195 = pneg %p101
      %p196 = pneg %p130
      %p197 = pneg %p127
      %p198 = scmp.lt.s32.totalorder %s15, 1
      %s199 = scalar_select %p198, %s15, 1
      %s200 = smul.addr %s199, 2
      %s201 = smul.addr %s200, 8
      %s202 = scalar_lea.vmem %s4, %s201
      %p203 = scmp.lt.s32.totalorder %s15, 1
      %s204 = scalar_select %p203, %s15, 1
      %s205 = smul.addr %s204, 2
      %s206 = smul.addr %s205, 4
      %s207 = scalar_lea.vmem %s0, %s206
      %p208 = scmp.lt.s32.totalorder %s15, 1
      %s209 = scalar_select %p208, %s15, 1
      %s210 = smul.addr %s209, 2
      %s211 = smul.addr %s210, 8
      %s212 = scalar_lea.vmem %s3, %s211
      %p213 = scmp.lt.s32.totalorder %s15, 1
      %s214 = scalar_select %p213, %s15, 1
      %s215 = smul.addr %s214, 2
      %s216 = smul.addr %s215, 8
      %s217 = scalar_lea.vmem %s4, %s216
      %v218 = vld [vmem:[%s207] sm:$0xf]
      %v219 = vld [vmem:[%s207 + $0x4] sm:$0xf]
      %v220 = vunpack.c.l.bf16 %v218
      %v221 = vunpack.c.l.bf16 %v219
      %v222 = vld [vmem:[%s1] sm:$0x1]
      %v224 = vlaneseq
      %v225 = vshrl.u32 %v224, 7
      %v226 = vsub.s32 0, %v225
      %v227 = vrot.slane %v222, %v226
      %v229 = vmul.f32 %v220, %v227
      %v230 = vmul.f32 %v221, %v227
      %v231 = vld [vmem:[%s2] sm:$0x1]
      %v233 = vlaneseq
      %v234 = vshrl.u32 %v233, 7
      %v235 = vsub.s32 0, %v234
      %v236 = vrot.slane %v231, %v235
      %v238 = vadd.f32 %v229, %v236
      %v239 = vadd.f32 %v230, %v236
      %v240 = vld [vmem:[%s212] sm:$0xff]
      %v241 = vld [vmem:[%s212 + $0x8] sm:$0xff]
      %v242 = vadd.f32 %v238, %v240
      %v243 = vadd.f32 %v239, %v241
      %v244 = vmax.f32 %v242, 0.0
      %v245 = vmax.f32 %v243, 0.0
      %246 = vst [vmem:[%s217] sm:$0xff] %v244
      %247 = vst [vmem:[%s217 + $0x8] sm:$0xff] %v245
      %p248 = scmp.lt.s32.totalorder %s15, 1
      %s249 = scalar_select %p248, %s15, 1
      %s250 = smul.addr %s249, 2
      %s251 = smul.addr %s250, 8
      %s252 = scalar_lea.vmem %s4, %s251
      // Predicated region
      $region37: #{basic_block_forward.5} parent=35 // pred_check
        %p253 = pneg %p127
      $region38: #{basic_block_forward.5} parent=35 // pred_check_branch
        %255 = sbr.rel (%p253) target = $region40
      $region39: #{basic_block_forward.5} parent=35 // pred_region
        _
      $region40: #{basic_block_forward.5} parent=35 // pred_fallthru
        _
    $region36: #{basic_block_forward.5} parent=5 // pred_fallthru
      _
    %p256 = scmp.le.s32.totalorder 2, %s10
    // Predicated region
    $region41: #{basic_block_forward.5} parent=5 // pred_check
      %p257 = pneg %p256
    $region42: #{basic_block_forward.5} parent=5 // pred_check_branch
      %259 = sbr.rel (%p257) target = $region44
    $region43: #{basic_block_forward.5} parent=5 // pred_region
      %s260 = ssub.s32 %s10, 2
      // Predicated region
      $region45: #{basic_block_forward.5} parent=43 // pred_check
        %p261 = pneg %p133
      $region46: #{basic_block_forward.5} parent=43 // pred_check_branch
        %263 = sbr.rel (%p261) target = $region48
      $region47: #{basic_block_forward.5} parent=43 // pred_region
        %p264 = scmp.lt.s32.totalorder %s16, 1
        %s265 = scalar_select %p264, %s16, 1
        %s266 = smul.addr %s265, 2
        %s267 = smul.addr %s266, 8
        %s268 = scalar_lea.vmem %s4, %s267
      $region48: #{basic_block_forward.5} parent=43 // pred_fallthru
        _
    $region44: #{basic_block_forward.5} parent=5 // pred_fallthru
      _
  $region6: #{basic_block_forward.5} parent=0 // loop_footer
    %s14 = sadd.s32 1, %s10
  $region7: #{basic_block_forward.5} parent=0 // loop_footer_branch
    %9 = sbr.rel target = $region3
  $region8: #{basic_block_forward.5} parent=0 // loop_exit
    _

// kernel: basic_block_forward.3
$region0: #{basic_block_forward.3}
  #allocation0 [shape = 'u32[]', space=smem, size = 0x4, offset = 0x4, fixed_abs, tag = 'smem constant byte address 0x4 - core index']
  #allocation1 [shape = 'u32[144,128]{1,0:T(1,128)}', space=vmem, size = 0x12000, scoped, tag = 'internal scratch']
  #allocation2 [shape = 'bf16[18,128]{1,0:T(8,128)(2,1)}', space=vmem, size = 0x1800, scoped, tag = 'scratch operand']
  %s0 = inlined_call_operand.vmem [shape: f32[2,16,128], index: 0, kind: input, shape index: {}]
  %s1 = inlined_call_operand.vmem [shape: bf16[3,128,128], index: 1, kind: input, shape index: {}]
  %s2 = inlined_call_operand.vmem [shape: bf16[2,16,128], index: 2, kind: output, shape index: {0}]
  %s3 = inlined_call_operand.vmem [shape: f32[2,2,128], index: 3, kind: output, shape index: {1}]
  %4 = xla_tuple %s2, %s3
  %s5 = sld [smem:[#allocation0]]
  $region49: #{basic_block_forward.3} parent=0
    _
  %s7 = ssub.s32 1, %s5
  %s8 = scalar_select 0, %s7, %s5
  loop: start=0, step=1, limit=4
  $region2: #{basic_block_forward.3} parent=0 // loop_pre_header
    _
  $region3: #{basic_block_forward.3} parent=0 // loop_header
    %s10 = sphi 0, %s14
    %p11 = scmp.ge.s32.totalorder %s10, 4
    %s20 = sphi 0, %s22
    %s23 = sphi 0, %s20
    %s24 = sphi 0, %s23
    %s40 = sphi 0, %s24
    %s44 = sphi 0, %s44
    %s46 = sphi 0, %s44
    %s47 = sphi 0, %s46
    %s61 = sphi 0, %s47
    %s67 = sphi 0, %s69
    %s70 = sphi 0, %s67
    %s71 = sphi 0, %s70
    %s87 = sphi 0, %s71
    %s93 = sphi 0, %s95
    %s96 = sphi 0, %s93
    %s97 = sphi 0, %s96
    %s113 = sphi 0, %s97
  $region4: #{basic_block_forward.3} parent=0 // loop_header_branch
    %13 = sbr.rel (%p11) target = $region8
  $region5: #{basic_block_forward.3} parent=0 // loop_body
    %s15 = ssub.s32 %s10, 1
    %s16 = ssub.s32 %s10, 2
    %s17 = sadd.s32 %s10, 1
    %s18 = ssub.s32 %s10, %s17
    %p19 = scmp.eq.s32.totalorder %s18, 0
    %s21 = sadd.s32 %s20, 1
    %s22 = scalar_select %p19, %s20, %s21
    %p25 = pneg %p19
    %p26 = scmp.eq.s32.totalorder %s10, 1
    %p27 = por %p25, %p26
    %p28 = scmp.ne.s32.totalorder %s20, %s23
    %p29 = scmp.eq.s32.totalorder %s10, 0
    %p30 = por %p28, %p29
    %p31 = scmp.ne.s32.totalorder %s20, %s23
    %p32 = scmp.eq.s32.totalorder %s15, 1
    %p33 = por %p31, %p32
    %p34 = scmp.ne.s32.totalorder %s23, %s24
    %p35 = scmp.eq.s32.totalorder %s15, 0
    %p36 = por %p34, %p35
    %p37 = scmp.ne.s32.totalorder %s23, %s24
    %p38 = scmp.eq.s32.totalorder %s16, 1
    %p39 = por %p37, %p38
    %p41 = scmp.ne.s32.totalorder %s24, %s40
    %p42 = scmp.eq.s32.totalorder %s16, 0
    %p43 = por %p41, %p42
    %s45 = sadd.s32 %s44, 1
    %p48 = scmp.eq.s32.totalorder %s10, 1
    %p49 = scmp.ne.s32.totalorder %s44, %s46
    %p50 = scmp.eq.s32.totalorder %s10, 0
    %p51 = por %p49, %p50
    %p52 = scmp.ne.s32.totalorder %s44, %s46
    %p53 = scmp.eq.s32.totalorder %s15, 1
    %p54 = por %p52, %p53
    %p55 = scmp.ne.s32.totalorder %s46, %s47
    %p56 = scmp.eq.s32.totalorder %s15, 0
    %p57 = por %p55, %p56
    %p58 = scmp.ne.s32.totalorder %s46, %s47
    %p59 = scmp.eq.s32.totalorder %s16, 1
    %p60 = por %p58, %p59
    %p62 = scmp.ne.s32.totalorder %s47, %s61
    %p63 = scmp.eq.s32.totalorder %s16, 0
    %p64 = por %p62, %p63
    %s65 = ssub.s32 %s10, %s17
    %p66 = scmp.eq.s32.totalorder %s65, 0
    %s68 = sadd.s32 %s67, 1
    %s69 = scalar_select %p66, %s67, %s68
    %p72 = pneg %p66
    %p73 = scmp.eq.s32.totalorder %s10, 1
    %p74 = por %p72, %p73
    %p75 = scmp.ne.s32.totalorder %s67, %s70
    %p76 = scmp.eq.s32.totalorder %s10, 0
    %p77 = por %p75, %p76
    %p78 = scmp.ne.s32.totalorder %s67, %s70
    %p79 = scmp.eq.s32.totalorder %s15, 1
    %p80 = por %p78, %p79
    %p81 = scmp.ne.s32.totalorder %s70, %s71
    %p82 = scmp.eq.s32.totalorder %s15, 0
    %p83 = por %p81, %p82
    %p84 = scmp.ne.s32.totalorder %s70, %s71
    %p85 = scmp.eq.s32.totalorder %s16, 1
    %p86 = por %p84, %p85
    %p88 = scmp.ne.s32.totalorder %s71, %s87
    %p89 = scmp.eq.s32.totalorder %s16, 0
    %p90 = por %p88, %p89
    %s91 = ssub.s32 %s10, %s17
    %p92 = scmp.eq.s32.totalorder %s91, 0
    %s94 = sadd.s32 %s93, 1
    %s95 = scalar_select %p92, %s93, %s94
    %p98 = pneg %p92
    %p99 = scmp.eq.s32.totalorder %s10, 1
    %p100 = por %p98, %p99
    %p101 = scmp.ne.s32.totalorder %s93, %s96
    %p102 = scmp.eq.s32.totalorder %s10, 0
    %p103 = por %p101, %p102
    %p104 = scmp.ne.s32.totalorder %s93, %s96
    %p105 = scmp.eq.s32.totalorder %s15, 1
    %p106 = por %p104, %p105
    %p107 = scmp.ne.s32.totalorder %s96, %s97
    %p108 = scmp.eq.s32.totalorder %s15, 0
    %p109 = por %p107, %p108
    %p110 = scmp.ne.s32.totalorder %s96, %s97
    %p111 = scmp.eq.s32.totalorder %s16, 1
    %p112 = por %p110, %p111
    %p114 = scmp.ne.s32.totalorder %s97, %s113
    %p115 = scmp.eq.s32.totalorder %s16, 0
    %p116 = por %p114, %p115
    %p117 = scmp.le.s32.totalorder 1, %s10
    %p118 = scmp.lt.s32.totalorder %s10, 3
    %p119 = pnand %p117, %p118
    %p120 = pneg %p119
    // Predicated region
    $region9: #{basic_block_forward.3} parent=5 // pred_check
      _
    $region10: #{basic_block_forward.3} parent=5 // pred_check_branch
      %122 = sbr.rel (%p119) target = $region12
    $region11: #{basic_block_forward.3} parent=5 // pred_region
      %s123 = ssub.s32 %s10, 1
      // Predicated region
      $region13: #{basic_block_forward.3} parent=11 // pred_check
        %p124 = pneg %p57
      $region14: #{basic_block_forward.3} parent=11 // pred_check_branch
        %126 = sbr.rel (%p124) target = $region16
      $region15: #{basic_block_forward.3} parent=11 // pred_region
        _
      $region16: #{basic_block_forward.3} parent=11 // pred_fallthru
        _
    $region12: #{basic_block_forward.3} parent=5 // pred_fallthru
      _
    %p127 = scmp.lt.s32.totalorder %s10, 2
    // Predicated region
    $region17: #{basic_block_forward.3} parent=5 // pred_check
      %p128 = pneg %p127
    $region18: #{basic_block_forward.3} parent=5 // pred_check_branch
      %130 = sbr.rel (%p128) target = $region20
    $region19: #{basic_block_forward.3} parent=5 // pred_region
      // Predicated region
      $region21: #{basic_block_forward.3} parent=19 // pred_check
        %p131 = pneg %p30
      $region22: #{basic_block_forward.3} parent=19 // pred_check_branch
        %133 = sbr.rel (%p131) target = $region24
      $region23: #{basic_block_forward.3} parent=19 // pred_region
        %p134 = scmp.lt.s32.totalorder %s10, 1
        %s135 = scalar_select %p134, %s10, 1
        %s136 = smul.addr %s135, 2
        %s137 = smul.addr %s136, 8
        %s138 = scalar_lea.vmem %s0, %s137
      $region24: #{basic_block_forward.3} parent=19 // pred_fallthru
        _
    $region20: #{basic_block_forward.3} parent=5 // pred_fallthru
      _
    %p139 = scmp.le.s32.totalorder 1, %s10
    %p140 = scmp.lt.s32.totalorder %s10, 3
    %p141 = pnand %p139, %p140
    %p142 = pneg %p141
    // Predicated region
    $region25: #{basic_block_forward.3} parent=5 // pred_check
      _
    $region26: #{basic_block_forward.3} parent=5 // pred_check_branch
      %144 = sbr.rel (%p141) target = $region28
    $region27: #{basic_block_forward.3} parent=5 // pred_region
      %s145 = ssub.s32 %s10, 1
      %p146 = scmp.lt.s32.totalorder %s15, 1
      %s147 = scalar_select %p146, %s15, 1
      %s148 = smul.addr %s147, 2
      %s149 = smul.addr %s148, 8
      %s150 = scalar_lea.vmem %s0, %s149
      %p151 = pneg %p36
      %p152 = pneg %p33
      %p153 = pneg %p57
      %p154 = pneg %p54
      %p155 = pneg %p83
      %p156 = pneg %p80
      %p157 = scmp.lt.s32.totalorder %s15, 1
      %s158 = scalar_select %p157, %s15, 1
      %s159 = smul.addr %s158, 2
      %s160 = smul.addr %s159, 4
      %s161 = scalar_lea.vmem %s2, %s160
      %p162 = pneg %p109
      %p163 = pneg %p106
      %p164 = scmp.lt.s32.totalorder %s15, 1
      %s165 = scalar_select %p164, %s15, 1
      %s166 = smul.addr %s165, 2
      %s167 = scalar_lea.vmem %s3, %s166
      %p168 = scmp.lt.s32.totalorder %s15, 1
      %s169 = scalar_select %p168, %s15, 1
      %s170 = smul.addr %s169, 2
      %s171 = smul.addr %s170, 8
      %s172 = scalar_lea.vmem %s0, %s171
      %p173 = scmp.lt.s32.totalorder %s15, 1
      %s174 = scalar_select %p173, %s15, 1
      %s175 = smul.addr %s174, 2
      %s176 = smul.addr %s175, 4
      %s177 = scalar_lea.vmem %s2, %s176
      %p178 = scmp.lt.s32.totalorder %s15, 1
      %s179 = scalar_select %p178, %s15, 1
      %s180 = smul.addr %s179, 2
      %s181 = scalar_lea.vmem %s3, %s180
      %v183 = vld [vmem:[%s172] sm:$0xff]
      %v184 = vld [vmem:[%s172 + $0x8] sm:$0xff]
      %vm185 = vcmask 1040384
      %vm186 = vsmask.f32 256
      %vm187 = vmand %vm185, %vm186
      %v188 = vld [vmem:[#allocation2] sm:$0x1]
      %v189 = vsel %vm187, 0, %v188
      %190 = vst [vmem:[#allocation2] sm:$0x1] %v189
      %vm191 = vsmask.f32 7938
      %vm192 = vmand %vm185, %vm191
      %v193 = vld [vmem:[#allocation2 + $0x8] sm:$0x1]
      %v194 = vsel %vm192, 0, %v193
      %195 = vst [vmem:[#allocation2 + $0x8] sm:$0x1] %v194
      %v196 = vpack.c.bf16 %v184, %v183
      %v198 = vunpack.c.l.b16 %v196
      %v199 = vunpack.c.h.b16 %v196
      %v200 = vpack.c.b16 %v198, %v198
      %v201 = vpack.c.b16 %v199, %v199
      %vm202 = vsmask.f32 4368
      %vm203 = vmor %vm186, %vm202
      %v205 = vshrl.u32 %v200, 16
      %v207 = vrot.slane %v205, 7
      %v208 = vshll.u32 %v200, 16
      %v210 = vor.u32 %v207, %v208
      %v211 = vrot.slane %v207, 4
      %v213 = vshrl.u32 %v201, 16
      %v215 = vrot.slane %v213, 7
      %v216 = vshll.u32 %v201, 16
      %v218 = vor.u32 %v215, %v216
      %v219 = vsel %vm203, %v211, %v218
      %v220 = vrot.slane %v215, 4
      %vm224 = vcmask 1043456
      %vm225 = vmand %vm224, %vm191
      %v226 = vld [vmem:[#allocation2] sm:$0xf]
      %v227 = vsel %vm225, %v210, %v226
      %228 = vst [vmem:[#allocation2] sm:$0xf] %v227
      %229 = vst [vmem:[#allocation2 + $0x4] sm:$0xf] %v219
      %v230 = vld [vmem:[#allocation2 + $0x8] sm:$0x1]
      %v231 = vsel %vm187, %v220, %v230
      %232 = vst [vmem:[#allocation2 + $0x8] sm:$0x1] %v231
      %v233 = vld [vmem:[#allocation2] sm:$0xf]
      %v234 = vld [vmem:[#allocation2 + $0x4] sm:$0xf]
      %v235 = vld [vmem:[%s1] sm:$0xf]
      %v236 = vld [vmem:[%s1 + $0x4] sm:$0xf]
      %v237 = vld [vmem:[%s1 + $0x8] sm:$0xf]
      %v238 = vld [vmem:[%s1 + $0xc] sm:$0xf]
      %v239 = vld [vmem:[%s1 + $0x10] sm:$0xf]
      %v240 = vld [vmem:[%s1 + $0x14] sm:$0xf]
      %v241 = vld [vmem:[%s1 + $0x18] sm:$0xf]
      %v242 = vld [vmem:[%s1 + $0x1c] sm:$0xf]
      %v243 = vld [vmem:[%s1 + $0x20] sm:$0xf]
      %v244 = vld [vmem:[%s1 + $0x24] sm:$0xf]
      %v245 = vld [vmem:[%s1 + $0x28] sm:$0xf]
      %v246 = vld [vmem:[%s1 + $0x2c] sm:$0xf]
      %v247 = vld [vmem:[%s1 + $0x30] sm:$0xf]
      %v248 = vld [vmem:[%s1 + $0x34] sm:$0xf]
      %v249 = vld [vmem:[%s1 + $0x38] sm:$0xf]
      %v250 = vld [vmem:[%s1 + $0x3c] sm:$0xf]
      %v251 = vld [vmem:[#allocation2 + $0x8] sm:$0x1]
      %s252 = scalar_lea.vmem %s1, 64
      %v253 = vld [vmem:[%s252] sm:$0xf]
      %v254 = vld [vmem:[%s252 + $0x4] sm:$0xf]
      %v255 = vld [vmem:[%s252 + $0x8] sm:$0xf]
      %v256 = vld [vmem:[%s252 + $0xc] sm:$0xf]
      %v257 = vld [vmem:[%s252 + $0x10] sm:$0xf]
      %v258 = vld [vmem:[%s252 + $0x14] sm:$0xf]
      %v259 = vld [vmem:[%s252 + $0x18] sm:$0xf]
      %v260 = vld [vmem:[%s252 + $0x1c] sm:$0xf]
      %v261 = vld [vmem:[%s252 + $0x20] sm:$0xf]
      %v262 = vld [vmem:[%s252 + $0x24] sm:$0xf]
      %v263 = vld [vmem:[%s252 + $0x28] sm:$0xf]
      %v264 = vld [vmem:[%s252 + $0x2c] sm:$0xf]
      %v265 = vld [vmem:[%s252 + $0x30] sm:$0xf]
      %v266 = vld [vmem:[%s252 + $0x34] sm:$0xf]
      %v267 = vld [vmem:[%s252 + $0x38] sm:$0xf]
      %v268 = vld [vmem:[%s252 + $0x3c] sm:$0xf]
      %v272 = vunpack.c.l.b16 %v233
      %v273 = vunpack.c.l.b16 %v234
      %v274 = vunpack.c.l.b16 %v251
      %v275 = vpack.c.b16 %v273, %v272
      %v276 = vpack.c.b16 %v274, %v274
      %vm277 = vsmask.f32 7424
      %v279 = vshrl.u32 %v275, 16
      %v281 = vshll.u32 %v275, 16
      %v283 = vrot.slane %v281, 1
      %v284 = vor.u32 %v279, %v283
      %v286 = vshll.u32 %v276, 16
      %v288 = vrot.slane %v286, 1
      %v289 = vsel %vm277, %v284, %v288
      %v307 = vunpack.c.l.b16 %v253
      %v308 = vunpack.c.l.b16 %v254
      %v309 = vunpack.c.l.b16 %v255
      %v310 = vunpack.c.l.b16 %v256
      %v311 = vunpack.c.l.b16 %v257
      %v312 = vunpack.c.l.b16 %v258
      %v313 = vunpack.c.l.b16 %v259
      %v314 = vunpack.c.l.b16 %v260
      %v315 = vunpack.c.l.b16 %v261
      %v316 = vunpack.c.l.b16 %v262
      %v317 = vunpack.c.l.b16 %v263
      %v318 = vunpack.c.l.b16 %v264
      %v319 = vunpack.c.l.b16 %v265
      %v320 = vunpack.c.l.b16 %v266
      %v321 = vunpack.c.l.b16 %v267
      %v322 = vunpack.c.l.b16 %v268
      %v323 = vpack.c.b16 %v308, %v307
      %v324 = vpack.c.b16 %v310, %v309
      %v325 = vpack.c.b16 %v312, %v311
      %v326 = vpack.c.b16 %v314, %v313
      %v327 = vpack.c.b16 %v316, %v315
      %v328 = vpack.c.b16 %v318, %v317
      %v329 = vpack.c.b16 %v320, %v319
      %v330 = vpack.c.b16 %v322, %v321
      %339 = vmatprep.subr.bf16.mxu0 0
      %340 = vmatpush1.bf16.msra.mxu0 %v330
      %341 = vmatprep.subr.bf16.mxu0 0
      %342 = vmatpush1.bf16.msra.mxu0 %v329
      %343 = vmatprep.subr.bf16.mxu0 0
      %344 = vmatpush1.bf16.msra.mxu0 %v328
      %345 = vmatprep.subr.bf16.mxu0 0
      %346 = vmatpush1.bf16.msra.mxu0 %v327
      %347 = vmatprep.subr.bf16.mxu0 0
      %348 = vmatpush1.bf16.msra.mxu0 %v326
      %349 = vmatprep.subr.bf16.mxu0 0
      %350 = vmatpush1.bf16.msra.mxu0 %v325
      %351 = vmatprep.subr.bf16.mxu0 0
      %352 = vmatpush1.bf16.msra.mxu0 %v324
      %353 = vmatprep.subr.bf16.mxu0 0
      %354 = vmatpush1.bf16.msra.mxu0 %v323
      %355 = vmatprep.subr.bf16.mxu0 0
      %356 = vmatpush2.bf16.msra.mxu0 0
      %357 = vmatprep.subr.bf16.mxu0 0
      %358 = vmatpush2.bf16.msra.mxu0 0
      %359 = vmatprep.subr.bf16.mxu0 0
      %360 = vmatpush2.bf16.msra.mxu0 0
      %361 = vmatprep.subr.bf16.mxu0 0
      %362 = vmatpush2.bf16.msra.mxu0 0
      %363 = vmatprep.subr.bf16.mxu0 0
      %364 = vmatpush2.bf16.msra.mxu0 0
      %365 = vmatprep.subr.bf16.mxu0 0
      %366 = vmatpush2.bf16.msra.mxu0 0
      %367 = vmatprep.subr.bf16.mxu0 0
      %368 = vmatpush2.bf16.msra.mxu0 0
      %369 = vmatprep.subr.bf16.mxu0 0
      %370 = vmatpush2.bf16.msra.mxu0 0
      %371 = vmatprep.mubr.bf16.mxu0 0
      %372 = vmatmul.mubr.bf16.gmra.mxu0 %v289
      %v373 = vpop.f32.mrf.mxu0
      %v374 = vadd.f32 0.0, %v373
      %v375 = vpop.f32.mrf.mxu0
      %v376 = vpop.f32.mrf.mxu0
      %v377 = vadd.f32 0.0, %v376
      %v378 = vpop.f32.mrf.mxu0
      %379 = vdwg.mxu0
      %v397 = vunpack.c.l.b16 %v235
      %v398 = vunpack.c.l.b16 %v236
      %v399 = vunpack.c.l.b16 %v237
      %v400 = vunpack.c.l.b16 %v238
      %v401 = vunpack.c.l.b16 %v239
      %v402 = vunpack.c.l.b16 %v240
      %v403 = vunpack.c.l.b16 %v241
      %v404 = vunpack.c.l.b16 %v242
      %v405 = vunpack.c.l.b16 %v243
      %v406 = vunpack.c.l.b16 %v244
      %v407 = vunpack.c.l.b16 %v245
      %v408 = vunpack.c.l.b16 %v246
      %v409 = vunpack.c.l.b16 %v247
      %v410 = vunpack.c.l.b16 %v248
      %v411 = vunpack.c.l.b16 %v249
      %v412 = vunpack.c.l.b16 %v250
      %v413 = vpack.c.b16 %v398, %v397
      %v414 = vpack.c.b16 %v400, %v399
      %v415 = vpack.c.b16 %v402, %v401
      %v416 = vpack.c.b16 %v404, %v403
      %v417 = vpack.c.b16 %v406, %v405
      %v418 = vpack.c.b16 %v408, %v407
      %v419 = vpack.c.b16 %v410, %v409
      %v420 = vpack.c.b16 %v412, %v411
      %429 = vmatprep.subr.bf16.mxu0 0
      %430 = vmatpush1.bf16.msra.mxu0 %v420
      %431 = vmatprep.subr.bf16.mxu0 0
      %432 = vmatpush1.bf16.msra.mxu0 %v419
      %433 = vmatprep.subr.bf16.mxu0 0
      %434 = vmatpush1.bf16.msra.mxu0 %v418
      %435 = vmatprep.subr.bf16.mxu0 0
      %436 = vmatpush1.bf16.msra.mxu0 %v417
      %437 = vmatprep.subr.bf16.mxu0 0
      %438 = vmatpush1.bf16.msra.mxu0 %v416
      %439 = vmatprep.subr.bf16.mxu0 0
      %440 = vmatpush1.bf16.msra.mxu0 %v415
      %441 = vmatprep.subr.bf16.mxu0 0
      %442 = vmatpush1.bf16.msra.mxu0 %v414
      %443 = vmatprep.subr.bf16.mxu0 0
      %444 = vmatpush1.bf16.msra.mxu0 %v413
      %445 = vmatprep.subr.bf16.mxu0 0
      %446 = vmatpush2.bf16.msra.mxu0 0
      %447 = vmatprep.subr.bf16.mxu0 0
      %448 = vmatpush2.bf16.msra.mxu0 0
      %449 = vmatprep.subr.bf16.mxu0 0
      %450 = vmatpush2.bf16.msra.mxu0 0
      %451 = vmatprep.subr.bf16.mxu0 0
      %452 = vmatpush2.bf16.msra.mxu0 0
      %453 = vmatprep.subr.bf16.mxu0 0
      %454 = vmatpush2.bf16.msra.mxu0 0
      %455 = vmatprep.subr.bf16.mxu0 0
      %456 = vmatpush2.bf16.msra.mxu0 0
      %457 = vmatprep.subr.bf16.mxu0 0
      %458 = vmatpush2.bf16.msra.mxu0 0
      %459 = vmatprep.subr.bf16.mxu0 0
      %460 = vmatpush2.bf16.msra.mxu0 0
      %461 = vmatprep.mubr.bf16.mxu0 0
      %462 = vmatmul.mubr.bf16.gmra.mxu0 %v275
      %v463 = vpop.f32.mrf.mxu0
      %v464 = vadd.f32 %v374, %v463
      %v465 = vpop.f32.mrf.mxu0
      %v466 = vpop.f32.mrf.mxu0
      %v467 = vadd.f32 %v377, %v466
      %v468 = vpop.f32.mrf.mxu0
      %469 = vdwg.mxu0
      %v470 = vld [vmem:[#allocation2] sm:$0xe]
      %s471 = scalar_lea.vmem %s1, 128
      %v472 = vld [vmem:[%s471] sm:$0xf]
      %v473 = vld [vmem:[%s471 + $0x4] sm:$0xf]
      %v474 = vld [vmem:[%s471 + $0x8] sm:$0xf]
      %v475 = vld [vmem:[%s471 + $0xc] sm:$0xf]
      %v476 = vld [vmem:[%s471 + $0x10] sm:$0xf]
      %v477 = vld [vmem:[%s471 + $0x14] sm:$0xf]
      %v478 = vld [vmem:[%s471 + $0x18] sm:$0xf]
      %v479 = vld [vmem:[%s471 + $0x1c] sm:$0xf]
      %v480 = vld [vmem:[%s471 + $0x20] sm:$0xf]
      %v481 = vld [vmem:[%s471 + $0x24] sm:$0xf]
      %v482 = vld [vmem:[%s471 + $0x28] sm:$0xf]
      %v483 = vld [vmem:[%s471 + $0x2c] sm:$0xf]
      %v484 = vld [vmem:[%s471 + $0x30] sm:$0xf]
      %v485 = vld [vmem:[%s471 + $0x34] sm:$0xf]
      %v486 = vld [vmem:[%s471 + $0x38] sm:$0xf]
      %v487 = vld [vmem:[%s471 + $0x3c] sm:$0xf]
      %v489 = vunpack.c.l.b16 %v470
      %v490 = vpack.c.b16 %v273, %v489
      %vm491 = vcmask 1046528
      %v492 = vrot.slane %v490, 1
      %v493 = vrot.slane %v276, 1
      %v494 = vsel %vm491, %v492, %v493
      %v512 = vunpack.c.l.b16 %v472
      %v513 = vunpack.c.l.b16 %v473
      %v514 = vunpack.c.l.b16 %v474
      %v515 = vunpack.c.l.b16 %v475
      %v516 = vunpack.c.l.b16 %v476
      %v517 = vunpack.c.l.b16 %v477
      %v518 = vunpack.c.l.b16 %v478
      %v519 = vunpack.c.l.b16 %v479
      %v520 = vunpack.c.l.b16 %v480
      %v521 = vunpack.c.l.b16 %v481
      %v522 = vunpack.c.l.b16 %v482
      %v523 = vunpack.c.l.b16 %v483
      %v524 = vunpack.c.l.b16 %v484
      %v525 = vunpack.c.l.b16 %v485
      %v526 = vunpack.c.l.b16 %v486
      %v527 = vunpack.c.l.b16 %v487
      %v528 = vpack.c.b16 %v513, %v512
      %v529 = vpack.c.b16 %v515, %v514
      %v530 = vpack.c.b16 %v517, %v516
      %v531 = vpack.c.b16 %v519, %v518
      %v532 = vpack.c.b16 %v521, %v520
      %v533 = vpack.c.b16 %v523, %v522
      %v534 = vpack.c.b16 %v525, %v524
      %v535 = vpack.c.b16 %v527, %v526
      %544 = vmatprep.subr.bf16.mxu0 0
      %545 = vmatpush1.bf16.msra.mxu0 %v535
      %546 = vmatprep.subr.bf16.mxu0 0
      %547 = vmatpush1.bf16.msra.mxu0 %v534
      %548 = vmatprep.subr.bf16.mxu0 0
      %549 = vmatpush1.bf16.msra.mxu0 %v533
      %550 = vmatprep.subr.bf16.mxu0 0
      %551 = vmatpush1.bf16.msra.mxu0 %v532
      %552 = vmatprep.subr.bf16.mxu0 0
      %553 = vmatpush1.bf16.msra.mxu0 %v531
      %554 = vmatprep.subr.bf16.mxu0 0
      %555 = vmatpush1.bf16.msra.mxu0 %v530
      %556 = vmatprep.subr.bf16.mxu0 0
      %557 = vmatpush1.bf16.msra.mxu0 %v529
      %558 = vmatprep.subr.bf16.mxu0 0
      %559 = vmatpush1.bf16.msra.mxu0 %v528
      %560 = vmatprep.subr.bf16.mxu0 0
      %561 = vmatpush2.bf16.msra.mxu0 0
      %562 = vmatprep.subr.bf16.mxu0 0
      %563 = vmatpush2.bf16.msra.mxu0 0
      %564 = vmatprep.subr.bf16.mxu0 0
      %565 = vmatpush2.bf16.msra.mxu0 0
      %566 = vmatprep.subr.bf16.mxu0 0
      %567 = vmatpush2.bf16.msra.mxu0 0
      %568 = vmatprep.subr.bf16.mxu0 0
      %569 = vmatpush2.bf16.msra.mxu0 0
      %570 = vmatprep.subr.bf16.mxu0 0
      %571 = vmatpush2.bf16.msra.mxu0 0
      %572 = vmatprep.subr.bf16.mxu0 0
      %573 = vmatpush2.bf16.msra.mxu0 0
      %574 = vmatprep.subr.bf16.mxu0 0
      %575 = vmatpush2.bf16.msra.mxu0 0
      %576 = vmatprep.mubr.bf16.mxu0 0
      %577 = vmatmul.mubr.bf16.gmra.mxu0 %v494
      %v578 = vpop.f32.mrf.mxu0
      %v579 = vadd.f32 0.0, %v578
      %v580 = vpop.f32.mrf.mxu0
      %v581 = vpop.f32.mrf.mxu0
      %v582 = vadd.f32 0.0, %v581
      %v583 = vpop.f32.mrf.mxu0
      %584 = vdwg.mxu0
      %v585 = vadd.f32 %v464, %v579
      %v586 = vadd.f32 %v467, %v582
      %v587 = vpack.c.bf16 %v586, %v585
      %v589 = vunpack.c.l.b16 %v587
      %v590 = vunpack.c.h.b16 %v587
      %v591 = vpack.c.b16 %v589, %v589
      %v592 = vpack.c.b16 %v590, %v590
      %595 = vst [vmem:[%s177] sm:$0xf] %v591
      %596 = vst [vmem:[%s177 + $0x4] sm:$0xf] %v592
      %v597 = vadd.f32 %v585, %v586
      %v598 = vrot.slane %v597, 4
      %v599 = vadd.f32 %v597, %v598
      %v600 = vrot.slane %v599, 2
      %v601 = vadd.f32 %v599, %v600
      %v602 = vrot.slane %v601, 1
      %v603 = vadd.f32 %v601, %v602
      %v604 = vmul.f32 %v585, %v585
      %v605 = vmul.f32 %v586, %v586
      %v606 = vadd.f32 %v604, %v605
      %v607 = vrot.slane %v606, 4
      %v608 = vadd.f32 %v606, %v607
      %v609 = vrot.slane %v608, 2
      %v610 = vadd.f32 %v608, %v609
      %v611 = vrot.slane %v610, 1
      %v612 = vadd.f32 %v610, %v611
      %vm613 = vcmask 1040384
      %v614 = vsel %vm613, %v603, %v612
      %615 = vst [vmem:[%s181] sm:$0x3] %v614
      %p616 = scmp.lt.s32.totalorder %s15, 1
      %s617 = scalar_select %p616, %s15, 1
      %s618 = smul.addr %s617, 2
      %s619 = smul.addr %s618, 4
      %s620 = scalar_lea.vmem %s2, %s619
      %p621 = scmp.lt.s32.totalorder %s15, 1
      %s622 = scalar_select %p621, %s15, 1
      %s623 = smul.addr %s622, 2
      %s624 = scalar_lea.vmem %s3, %s623
      // Predicated region
      $region29: #{basic_block_forward.3} parent=27 // pred_check
        %p625 = pneg %p80
      $region30: #{basic_block_forward.3} parent=27 // pred_check_branch
        %627 = sbr.rel (%p625) target = $region32
      $region31: #{basic_block_forward.3} parent=27 // pred_region
        _
      $region32: #{basic_block_forward.3} parent=27 // pred_fallthru
        _
      // Predicated region
      $region33: #{basic_block_forward.3} parent=27 // pred_check
        %p628 = pneg %p106
      $region34: #{basic_block_forward.3} parent=27 // pred_check_branch
        %630 = sbr.rel (%p628) target = $region36
      $region35: #{basic_block_forward.3} parent=27 // pred_region
        _
      $region36: #{basic_block_forward.3} parent=27 // pred_fallthru
        _
    $region28: #{basic_block_forward.3} parent=5 // pred_fallthru
      _
    %p631 = scmp.le.s32.totalorder 2, %s10
    // Predicated region
    $region37: #{basic_block_forward.3} parent=5 // pred_check
      %p632 = pneg %p631
    $region38: #{basic_block_forward.3} parent=5 // pred_check_branch
      %634 = sbr.rel (%p632) target = $region40
    $region39: #{basic_block_forward.3} parent=5 // pred_region
      %s635 = ssub.s32 %s10, 2
      // Predicated region
      $region41: #{basic_block_forward.3} parent=39 // pred_check
        %p636 = pneg %p86
      $region42: #{basic_block_forward.3} parent=39 // pred_check_branch
        %638 = sbr.rel (%p636) target = $region44
      $region43: #{basic_block_forward.3} parent=39 // pred_region
        %p639 = scmp.lt.s32.totalorder %s16, 1
        %s640 = scalar_select %p639, %s16, 1
        %s641 = smul.addr %s640, 2
        %s642 = smul.addr %s641, 4
        %s643 = scalar_lea.vmem %s2, %s642
      $region44: #{basic_block_forward.3} parent=39 // pred_fallthru
        _
      // Predicated region
      $region45: #{basic_block_forward.3} parent=39 // pred_check
        %p644 = pneg %p112
      $region46: #{basic_block_forward.3} parent=39 // pred_check_branch
        %646 = sbr.rel (%p644) target = $region48
      $region47: #{basic_block_forward.3} parent=39 // pred_region
        %p647 = scmp.lt.s32.totalorder %s16, 1
        %s648 = scalar_select %p647, %s16, 1
        %s649 = smul.addr %s648, 2
        %s650 = scalar_lea.vmem %s3, %s649
      $region48: #{basic_block_forward.3} parent=39 // pred_fallthru
        _
    $region40: #{basic_block_forward.3} parent=5 // pred_fallthru
      _
  $region6: #{basic_block_forward.3} parent=0 // loop_footer
    %s14 = sadd.s32 1, %s10
  $region7: #{basic_block_forward.3} parent=0 // loop_footer_branch
    %9 = sbr.rel target = $region3
  $region8: #{basic_block_forward.3} parent=0 // loop_exit
    _

// kernel: basic_block_forward.4
$region0: #{basic_block_forward.4}
  #allocation0 [shape = 'u32[]', space=smem, size = 0x4, offset = 0x4, fixed_abs, tag = 'smem constant byte address 0x4 - core index']
  #allocation1 [shape = 'u32[144,128]{1,0:T(1,128)}', space=vmem, size = 0x12000, scoped, tag = 'internal scratch']
  #allocation2 [shape = 'bf16[18,128]{1,0:T(8,128)(2,1)}', space=vmem, size = 0x1800, scoped, tag = 'scratch operand']
  %s0 = inlined_call_operand.vmem [shape: bf16[2,16,128], index: 0, kind: input, shape index: {}]
  %s1 = inlined_call_operand.vmem [shape: f32[1,128], index: 1, kind: input, shape index: {}]
  %s2 = inlined_call_operand.vmem [shape: f32[1,128], index: 2, kind: input, shape index: {}]
  %s3 = inlined_call_operand.vmem [shape: bf16[3,128,128], index: 3, kind: input, shape index: {}]
  %s4 = inlined_call_operand.vmem [shape: bf16[2,16,128], index: 4, kind: output, shape index: {0}]
  %s5 = inlined_call_operand.vmem [shape: f32[2,2,128], index: 5, kind: output, shape index: {1}]
  %6 = xla_tuple %s4, %s5
  %s7 = sld [smem:[#allocation0]]
  $region57: #{basic_block_forward.4} parent=0
    _
  %s9 = ssub.s32 1, %s7
  %s10 = scalar_select 0, %s9, %s7
  loop: start=0, step=1, limit=4
  $region2: #{basic_block_forward.4} parent=0 // loop_pre_header
    _
  $region3: #{basic_block_forward.4} parent=0 // loop_header
    %s12 = sphi 0, %s16
    %p13 = scmp.ge.s32.totalorder %s12, 4
    %s22 = sphi 0, %s24
    %s25 = sphi 0, %s22
    %s26 = sphi 0, %s25
    %s42 = sphi 0, %s26
    %s46 = sphi 0, %s46
    %s48 = sphi 0, %s46
    %s49 = sphi 0, %s48
    %s63 = sphi 0, %s49
    %s67 = sphi 0, %s67
    %s69 = sphi 0, %s67
    %s70 = sphi 0, %s69
    %s84 = sphi 0, %s70
    %s88 = sphi 0, %s88
    %s90 = sphi 0, %s88
    %s91 = sphi 0, %s90
    %s105 = sphi 0, %s91
    %s111 = sphi 0, %s113
    %s114 = sphi 0, %s111
    %s115 = sphi 0, %s114
    %s131 = sphi 0, %s115
    %s137 = sphi 0, %s139
    %s140 = sphi 0, %s137
    %s141 = sphi 0, %s140
    %s157 = sphi 0, %s141
  $region4: #{basic_block_forward.4} parent=0 // loop_header_branch
    %15 = sbr.rel (%p13) target = $region8
  $region5: #{basic_block_forward.4} parent=0 // loop_body
    %s17 = ssub.s32 %s12, 1
    %s18 = ssub.s32 %s12, 2
    %s19 = sadd.s32 %s12, 1
    %s20 = ssub.s32 %s12, %s19
    %p21 = scmp.eq.s32.totalorder %s20, 0
    %s23 = sadd.s32 %s22, 1
    %s24 = scalar_select %p21, %s22, %s23
    %p27 = pneg %p21
    %p28 = scmp.eq.s32.totalorder %s12, 1
    %p29 = por %p27, %p28
    %p30 = scmp.ne.s32.totalorder %s22, %s25
    %p31 = scmp.eq.s32.totalorder %s12, 0
    %p32 = por %p30, %p31
    %p33 = scmp.ne.s32.totalorder %s22, %s25
    %p34 = scmp.eq.s32.totalorder %s17, 1
    %p35 = por %p33, %p34
    %p36 = scmp.ne.s32.totalorder %s25, %s26
    %p37 = scmp.eq.s32.totalorder %s17, 0
    %p38 = por %p36, %p37
    %p39 = scmp.ne.s32.totalorder %s25, %s26
    %p40 = scmp.eq.s32.totalorder %s18, 1
    %p41 = por %p39, %p40
    %p43 = scmp.ne.s32.totalorder %s26, %s42
    %p44 = scmp.eq.s32.totalorder %s18, 0
    %p45 = por %p43, %p44
    %s47 = sadd.s32 %s46, 1
    %p50 = scmp.eq.s32.totalorder %s12, 1
    %p51 = scmp.ne.s32.totalorder %s46, %s48
    %p52 = scmp.eq.s32.totalorder %s12, 0
    %p53 = por %p51, %p52
    %p54 = scmp.ne.s32.totalorder %s46, %s48
    %p55 = scmp.eq.s32.totalorder %s17, 1
    %p56 = por %p54, %p55
    %p57 = scmp.ne.s32.totalorder %s48, %s49
    %p58 = scmp.eq.s32.totalorder %s17, 0
    %p59 = por %p57, %p58
    %p60 = scmp.ne.s32.totalorder %s48, %s49
    %p61 = scmp.eq.s32.totalorder %s18, 1
    %p62 = por %p60, %p61
    %p64 = scmp.ne.s32.totalorder %s49, %s63
    %p65 = scmp.eq.s32.totalorder %s18, 0
    %p66 = por %p64, %p65
    %s68 = sadd.s32 %s67, 1
    %p71 = scmp.eq.s32.totalorder %s12, 1
    %p72 = scmp.ne.s32.totalorder %s67, %s69
    %p73 = scmp.eq.s32.totalorder %s12, 0
    %p74 = por %p72, %p73
    %p75 = scmp.ne.s32.totalorder %s67, %s69
    %p76 = scmp.eq.s32.totalorder %s17, 1
    %p77 = por %p75, %p76
    %p78 = scmp.ne.s32.totalorder %s69, %s70
    %p79 = scmp.eq.s32.totalorder %s17, 0
    %p80 = por %p78, %p79
    %p81 = scmp.ne.s32.totalorder %s69, %s70
    %p82 = scmp.eq.s32.totalorder %s18, 1
    %p83 = por %p81, %p82
    %p85 = scmp.ne.s32.totalorder %s70, %s84
    %p86 = scmp.eq.s32.totalorder %s18, 0
    %p87 = por %p85, %p86
    %s89 = sadd.s32 %s88, 1
    %p92 = scmp.eq.s32.totalorder %s12, 1
    %p93 = scmp.ne.s32.totalorder %s88, %s90
    %p94 = scmp.eq.s32.totalorder %s12, 0
    %p95 = por %p93, %p94
    %p96 = scmp.ne.s32.totalorder %s88, %s90
    %p97 = scmp.eq.s32.totalorder %s17, 1
    %p98 = por %p96, %p97
    %p99 = scmp.ne.s32.totalorder %s90, %s91
    %p100 = scmp.eq.s32.totalorder %s17, 0
    %p101 = por %p99, %p100
    %p102 = scmp.ne.s32.totalorder %s90, %s91
    %p103 = scmp.eq.s32.totalorder %s18, 1
    %p104 = por %p102, %p103
    %p106 = scmp.ne.s32.totalorder %s91, %s105
    %p107 = scmp.eq.s32.totalorder %s18, 0
    %p108 = por %p106, %p107
    %s109 = ssub.s32 %s12, %s19
    %p110 = scmp.eq.s32.totalorder %s109, 0
    %s112 = sadd.s32 %s111, 1
    %s113 = scalar_select %p110, %s111, %s112
    %p116 = pneg %p110
    %p117 = scmp.eq.s32.totalorder %s12, 1
    %p118 = por %p116, %p117
    %p119 = scmp.ne.s32.totalorder %s111, %s114
    %p120 = scmp.eq.s32.totalorder %s12, 0
    %p121 = por %p119, %p120
    %p122 = scmp.ne.s32.totalorder %s111, %s114
    %p123 = scmp.eq.s32.totalorder %s17, 1
    %p124 = por %p122, %p123
    %p125 = scmp.ne.s32.totalorder %s114, %s115
    %p126 = scmp.eq.s32.totalorder %s17, 0
    %p127 = por %p125, %p126
    %p128 = scmp.ne.s32.totalorder %s114, %s115
    %p129 = scmp.eq.s32.totalorder %s18, 1
    %p130 = por %p128, %p129
    %p132 = scmp.ne.s32.totalorder %s115, %s131
    %p133 = scmp.eq.s32.totalorder %s18, 0
    %p134 = por %p132, %p133
    %s135 = ssub.s32 %s12, %s19
    %p136 = scmp.eq.s32.totalorder %s135, 0
    %s138 = sadd.s32 %s137, 1
    %s139 = scalar_select %p136, %s137, %s138
    %p142 = pneg %p136
    %p143 = scmp.eq.s32.totalorder %s12, 1
    %p144 = por %p142, %p143
    %p145 = scmp.ne.s32.totalorder %s137, %s140
    %p146 = scmp.eq.s32.totalorder %s12, 0
    %p147 = por %p145, %p146
    %p148 = scmp.ne.s32.totalorder %s137, %s140
    %p149 = scmp.eq.s32.totalorder %s17, 1
    %p150 = por %p148, %p149
    %p151 = scmp.ne.s32.totalorder %s140, %s141
    %p152 = scmp.eq.s32.totalorder %s17, 0
    %p153 = por %p151, %p152
    %p154 = scmp.ne.s32.totalorder %s140, %s141
    %p155 = scmp.eq.s32.totalorder %s18, 1
    %p156 = por %p154, %p155
    %p158 = scmp.ne.s32.totalorder %s141, %s157
    %p159 = scmp.eq.s32.totalorder %s18, 0
    %p160 = por %p158, %p159
    %p161 = scmp.le.s32.totalorder 1, %s12
    %p162 = scmp.lt.s32.totalorder %s12, 3
    %p163 = pnand %p161, %p162
    %p164 = pneg %p163
    // Predicated region
    $region9: #{basic_block_forward.4} parent=5 // pred_check
      _
    $region10: #{basic_block_forward.4} parent=5 // pred_check_branch
      %166 = sbr.rel (%p163) target = $region12
    $region11: #{basic_block_forward.4} parent=5 // pred_region
      %s167 = ssub.s32 %s12, 1
      // Predicated region
      $region13: #{basic_block_forward.4} parent=11 // pred_check
        %p168 = pneg %p59
      $region14: #{basic_block_forward.4} parent=11 // pred_check_branch
        %170 = sbr.rel (%p168) target = $region16
      $region15: #{basic_block_forward.4} parent=11 // pred_region
        _
      $region16: #{basic_block_forward.4} parent=11 // pred_fallthru
        _
      // Predicated region
      $region17: #{basic_block_forward.4} parent=11 // pred_check
        %p171 = pneg %p80
      $region18: #{basic_block_forward.4} parent=11 // pred_check_branch
        %173 = sbr.rel (%p171) target = $region20
      $region19: #{basic_block_forward.4} parent=11 // pred_region
        _
      $region20: #{basic_block_forward.4} parent=11 // pred_fallthru
        _
      // Predicated region
      $region21: #{basic_block_forward.4} parent=11 // pred_check
        %p174 = pneg %p101
      $region22: #{basic_block_forward.4} parent=11 // pred_check_branch
        %176 = sbr.rel (%p174) target = $region24
      $region23: #{basic_block_forward.4} parent=11 // pred_region
        _
      $region24: #{basic_block_forward.4} parent=11 // pred_fallthru
        _
    $region12: #{basic_block_forward.4} parent=5 // pred_fallthru
      _
    %p177 = scmp.lt.s32.totalorder %s12, 2
    // Predicated region
    $region25: #{basic_block_forward.4} parent=5 // pred_check
      %p178 = pneg %p177
    $region26: #{basic_block_forward.4} parent=5 // pred_check_branch
      %180 = sbr.rel (%p178) target = $region28
    $region27: #{basic_block_forward.4} parent=5 // pred_region
      // Predicated region
      $region29: #{basic_block_forward.4} parent=27 // pred_check
        %p181 = pneg %p32
      $region30: #{basic_block_forward.4} parent=27 // pred_check_branch
        %183 = sbr.rel (%p181) target = $region32
      $region31: #{basic_block_forward.4} parent=27 // pred_region
        %p184 = scmp.lt.s32.totalorder %s12, 1
        %s185 = scalar_select %p184, %s12, 1
        %s186 = smul.addr %s185, 2
        %s187 = smul.addr %s186, 4
        %s188 = scalar_lea.vmem %s0, %s187
      $region32: #{basic_block_forward.4} parent=27 // pred_fallthru
        _
    $region28: #{basic_block_forward.4} parent=5 // pred_fallthru
      _
    %p189 = scmp.le.s32.totalorder 1, %s12
    %p190 = scmp.lt.s32.totalorder %s12, 3
    %p191 = pnand %p189, %p190
    %p192 = pneg %p191
    // Predicated region
    $region33: #{basic_block_forward.4} parent=5 // pred_check
      _
    $region34: #{basic_block_forward.4} parent=5 // pred_check_branch
      %194 = sbr.rel (%p191) target = $region36
    $region35: #{basic_block_forward.4} parent=5 // pred_region
      %s195 = ssub.s32 %s12, 1
      %p196 = scmp.lt.s32.totalorder %s17, 1
      %s197 = scalar_select %p196, %s17, 1
      %s198 = smul.addr %s197, 2
      %s199 = smul.addr %s198, 4
      %s200 = scalar_lea.vmem %s0, %s199
      %p201 = pneg %p38
      %p202 = pneg %p35
      %p203 = pneg %p59
      %p204 = pneg %p56
      %p205 = pneg %p80
      %p206 = pneg %p77
      %p207 = pneg %p101
      %p208 = pneg %p98
      %p209 = pneg %p127
      %p210 = pneg %p124
      %p211 = scmp.lt.s32.totalorder %s17, 1
      %s212 = scalar_select %p211, %s17, 1
      %s213 = smul.addr %s212, 2
      %s214 = smul.addr %s213, 4
      %s215 = scalar_lea.vmem %s4, %s214
      %p216 = pneg %p153
      %p217 = pneg %p150
      %p218 = scmp.lt.s32.totalorder %s17, 1
      %s219 = scalar_select %p218, %s17, 1
      %s220 = smul.addr %s219, 2
      %s221 = scalar_lea.vmem %s5, %s220
      %p222 = scmp.lt.s32.totalorder %s17, 1
      %s223 = scalar_select %p222, %s17, 1
      %s224 = smul.addr %s223, 2
      %s225 = smul.addr %s224, 4
      %s226 = scalar_lea.vmem %s0, %s225
      %p227 = scmp.lt.s32.totalorder %s17, 1
      %s228 = scalar_select %p227, %s17, 1
      %s229 = smul.addr %s228, 2
      %s230 = smul.addr %s229, 4
      %s231 = scalar_lea.vmem %s4, %s230
      %p232 = scmp.lt.s32.totalorder %s17, 1
      %s233 = scalar_select %p232, %s17, 1
      %s234 = smul.addr %s233, 2
      %s235 = scalar_lea.vmem %s5, %s234
      %v237 = vld [vmem:[%s226] sm:$0xf]
      %v238 = vld [vmem:[%s226 + $0x4] sm:$0xf]
      %v239 = vunpack.c.l.bf16 %v237
      %v240 = vunpack.c.l.bf16 %v238
      %v241 = vld [vmem:[%s1] sm:$0x1]
      %v243 = vlaneseq
      %v244 = vshrl.u32 %v243, 7
      %v245 = vsub.s32 0, %v244
      %v246 = vrot.slane %v241, %v245
      %v248 = vmul.f32 %v239, %v246
      %v249 = vmul.f32 %v240, %v246
      %v250 = vld [vmem:[%s2] sm:$0x1]
      %v252 = vlaneseq
      %v253 = vshrl.u32 %v252, 7
      %v254 = vsub.s32 0, %v253
      %v255 = vrot.slane %v250, %v254
      %v257 = vadd.f32 %v248, %v255
      %v258 = vadd.f32 %v249, %v255
      %v259 = vmax.f32 %v257, 0.0
      %v260 = vmax.f32 %v258, 0.0
      %vm261 = vcmask 1040384
      %vm262 = vsmask.f32 256
      %vm263 = vmand %vm261, %vm262
      %v264 = vld [vmem:[#allocation2] sm:$0x1]
      %v265 = vsel %vm263, 0, %v264
      %266 = vst [vmem:[#allocation2] sm:$0x1] %v265
      %vm267 = vsmask.f32 7938
      %vm268 = vmand %vm261, %vm267
      %v269 = vld [vmem:[#allocation2 + $0x8] sm:$0x1]
      %v270 = vsel %vm268, 0, %v269
      %271 = vst [vmem:[#allocation2 + $0x8] sm:$0x1] %v270
      %v272 = vpack.c.bf16 %v260, %v259
      %v274 = vunpack.c.l.b16 %v272
      %v275 = vunpack.c.h.b16 %v272
      %v276 = vpack.c.b16 %v274, %v274
      %v277 = vpack.c.b16 %v275, %v275
      %vm278 = vsmask.f32 4368
      %vm279 = vmor %vm262, %vm278
      %v281 = vshrl.u32 %v276, 16
      %v283 = vrot.slane %v281, 7
      %v284 = vshll.u32 %v276, 16
      %v286 = vor.u32 %v283, %v284
      %v287 = vrot.slane %v283, 4
      %v289 = vshrl.u32 %v277, 16
      %v291 = vrot.slane %v289, 7
      %v292 = vshll.u32 %v277, 16
      %v294 = vor.u32 %v291, %v292
      %v295 = vsel %vm279, %v287, %v294
      %v296 = vrot.slane %v291, 4
      %vm300 = vcmask 1043456
      %vm301 = vmand %vm300, %vm267
      %v302 = vld [vmem:[#allocation2] sm:$0xf]
      %v303 = vsel %vm301, %v286, %v302
      %304 = vst [vmem:[#allocation2] sm:$0xf] %v303
      %305 = vst [vmem:[#allocation2 + $0x4] sm:$0xf] %v295
      %v306 = vld [vmem:[#allocation2 + $0x8] sm:$0x1]
      %v307 = vsel %vm263, %v296, %v306
      %308 = vst [vmem:[#allocation2 + $0x8] sm:$0x1] %v307
      %v309 = vld [vmem:[#allocation2] sm:$0xf]
      %v310 = vld [vmem:[#allocation2 + $0x4] sm:$0xf]
      %v311 = vld [vmem:[%s3] sm:$0xf]
      %v312 = vld [vmem:[%s3 + $0x4] sm:$0xf]
      %v313 = vld [vmem:[%s3 + $0x8] sm:$0xf]
      %v314 = vld [vmem:[%s3 + $0xc] sm:$0xf]
      %v315 = vld [vmem:[%s3 + $0x10] sm:$0xf]
      %v316 = vld [vmem:[%s3 + $0x14] sm:$0xf]
      %v317 = vld [vmem:[%s3 + $0x18] sm:$0xf]
      %v318 = vld [vmem:[%s3 + $0x1c] sm:$0xf]
      %v319 = vld [vmem:[%s3 + $0x20] sm:$0xf]
      %v320 = vld [vmem:[%s3 + $0x24] sm:$0xf]
      %v321 = vld [vmem:[%s3 + $0x28] sm:$0xf]
      %v322 = vld [vmem:[%s3 + $0x2c] sm:$0xf]
      %v323 = vld [vmem:[%s3 + $0x30] sm:$0xf]
      %v324 = vld [vmem:[%s3 + $0x34] sm:$0xf]
      %v325 = vld [vmem:[%s3 + $0x38] sm:$0xf]
      %v326 = vld [vmem:[%s3 + $0x3c] sm:$0xf]
      %v327 = vld [vmem:[#allocation2 + $0x8] sm:$0x1]
      %s328 = scalar_lea.vmem %s3, 64
      %v329 = vld [vmem:[%s328] sm:$0xf]
      %v330 = vld [vmem:[%s328 + $0x4] sm:$0xf]
      %v331 = vld [vmem:[%s328 + $0x8] sm:$0xf]
      %v332 = vld [vmem:[%s328 + $0xc] sm:$0xf]
      %v333 = vld [vmem:[%s328 + $0x10] sm:$0xf]
      %v334 = vld [vmem:[%s328 + $0x14] sm:$0xf]
      %v335 = vld [vmem:[%s328 + $0x18] sm:$0xf]
      %v336 = vld [vmem:[%s328 + $0x1c] sm:$0xf]
      %v337 = vld [vmem:[%s328 + $0x20] sm:$0xf]
      %v338 = vld [vmem:[%s328 + $0x24] sm:$0xf]
      %v339 = vld [vmem:[%s328 + $0x28] sm:$0xf]
      %v340 = vld [vmem:[%s328 + $0x2c] sm:$0xf]
      %v341 = vld [vmem:[%s328 + $0x30] sm:$0xf]
      %v342 = vld [vmem:[%s328 + $0x34] sm:$0xf]
      %v343 = vld [vmem:[%s328 + $0x38] sm:$0xf]
      %v344 = vld [vmem:[%s328 + $0x3c] sm:$0xf]
      %v348 = vunpack.c.l.b16 %v309
      %v349 = vunpack.c.l.b16 %v310
      %v350 = vunpack.c.l.b16 %v327
      %v351 = vpack.c.b16 %v349, %v348
      %v352 = vpack.c.b16 %v350, %v350
      %vm353 = vsmask.f32 7424
      %v355 = vshrl.u32 %v351, 16
      %v357 = vshll.u32 %v351, 16
      %v359 = vrot.slane %v357, 1
      %v360 = vor.u32 %v355, %v359
      %v362 = vshll.u32 %v352, 16
      %v364 = vrot.slane %v362, 1
      %v365 = vsel %vm353, %v360, %v364
      %v383 = vunpack.c.l.b16 %v329
      %v384 = vunpack.c.l.b16 %v330
      %v385 = vunpack.c.l.b16 %v331
      %v386 = vunpack.c.l.b16 %v332
      %v387 = vunpack.c.l.b16 %v333
      %v388 = vunpack.c.l.b16 %v334
      %v389 = vunpack.c.l.b16 %v335
      %v390 = vunpack.c.l.b16 %v336
      %v391 = vunpack.c.l.b16 %v337
      %v392 = vunpack.c.l.b16 %v338
      %v393 = vunpack.c.l.b16 %v339
      %v394 = vunpack.c.l.b16 %v340
      %v395 = vunpack.c.l.b16 %v341
      %v396 = vunpack.c.l.b16 %v342
      %v397 = vunpack.c.l.b16 %v343
      %v398 = vunpack.c.l.b16 %v344
      %v399 = vpack.c.b16 %v384, %v383
      %v400 = vpack.c.b16 %v386, %v385
      %v401 = vpack.c.b16 %v388, %v387
      %v402 = vpack.c.b16 %v390, %v389
      %v403 = vpack.c.b16 %v392, %v391
      %v404 = vpack.c.b16 %v394, %v393
      %v405 = vpack.c.b16 %v396, %v395
      %v406 = vpack.c.b16 %v398, %v397
      %415 = vmatprep.subr.bf16.mxu0 0
      %416 = vmatpush1.bf16.msra.mxu0 %v406
      %417 = vmatprep.subr.bf16.mxu0 0
      %418 = vmatpush1.bf16.msra.mxu0 %v405
      %419 = vmatprep.subr.bf16.mxu0 0
      %420 = vmatpush1.bf16.msra.mxu0 %v404
      %421 = vmatprep.subr.bf16.mxu0 0
      %422 = vmatpush1.bf16.msra.mxu0 %v403
      %423 = vmatprep.subr.bf16.mxu0 0
      %424 = vmatpush1.bf16.msra.mxu0 %v402
      %425 = vmatprep.subr.bf16.mxu0 0
      %426 = vmatpush1.bf16.msra.mxu0 %v401
      %427 = vmatprep.subr.bf16.mxu0 0
      %428 = vmatpush1.bf16.msra.mxu0 %v400
      %429 = vmatprep.subr.bf16.mxu0 0
      %430 = vmatpush1.bf16.msra.mxu0 %v399
      %431 = vmatprep.subr.bf16.mxu0 0
      %432 = vmatpush2.bf16.msra.mxu0 0
      %433 = vmatprep.subr.bf16.mxu0 0
      %434 = vmatpush2.bf16.msra.mxu0 0
      %435 = vmatprep.subr.bf16.mxu0 0
      %436 = vmatpush2.bf16.msra.mxu0 0
      %437 = vmatprep.subr.bf16.mxu0 0
      %438 = vmatpush2.bf16.msra.mxu0 0
      %439 = vmatprep.subr.bf16.mxu0 0
      %440 = vmatpush2.bf16.msra.mxu0 0
      %441 = vmatprep.subr.bf16.mxu0 0
      %442 = vmatpush2.bf16.msra.mxu0 0
      %443 = vmatprep.subr.bf16.mxu0 0
      %444 = vmatpush2.bf16.msra.mxu0 0
      %445 = vmatprep.subr.bf16.mxu0 0
      %446 = vmatpush2.bf16.msra.mxu0 0
      %447 = vmatprep.mubr.bf16.mxu0 0
      %448 = vmatmul.mubr.bf16.gmra.mxu0 %v365
      %v449 = vpop.f32.mrf.mxu0
      %v450 = vadd.f32 0.0, %v449
      %v451 = vpop.f32.mrf.mxu0
      %v452 = vpop.f32.mrf.mxu0
      %v453 = vadd.f32 0.0, %v452
      %v454 = vpop.f32.mrf.mxu0
      %455 = vdwg.mxu0
      %v473 = vunpack.c.l.b16 %v311
      %v474 = vunpack.c.l.b16 %v312
      %v475 = vunpack.c.l.b16 %v313
      %v476 = vunpack.c.l.b16 %v314
      %v477 = vunpack.c.l.b16 %v315
      %v478 = vunpack.c.l.b16 %v316
      %v479 = vunpack.c.l.b16 %v317
      %v480 = vunpack.c.l.b16 %v318
      %v481 = vunpack.c.l.b16 %v319
      %v482 = vunpack.c.l.b16 %v320
      %v483 = vunpack.c.l.b16 %v321
      %v484 = vunpack.c.l.b16 %v322
      %v485 = vunpack.c.l.b16 %v323
      %v486 = vunpack.c.l.b16 %v324
      %v487 = vunpack.c.l.b16 %v325
      %v488 = vunpack.c.l.b16 %v326
      %v489 = vpack.c.b16 %v474, %v473
      %v490 = vpack.c.b16 %v476, %v475
      %v491 = vpack.c.b16 %v478, %v477
      %v492 = vpack.c.b16 %v480, %v479
      %v493 = vpack.c.b16 %v482, %v481
      %v494 = vpack.c.b16 %v484, %v483
      %v495 = vpack.c.b16 %v486, %v485
      %v496 = vpack.c.b16 %v488, %v487
      %505 = vmatprep.subr.bf16.mxu0 0
      %506 = vmatpush1.bf16.msra.mxu0 %v496
      %507 = vmatprep.subr.bf16.mxu0 0
      %508 = vmatpush1.bf16.msra.mxu0 %v495
      %509 = vmatprep.subr.bf16.mxu0 0
      %510 = vmatpush1.bf16.msra.mxu0 %v494
      %511 = vmatprep.subr.bf16.mxu0 0
      %512 = vmatpush1.bf16.msra.mxu0 %v493
      %513 = vmatprep.subr.bf16.mxu0 0
      %514 = vmatpush1.bf16.msra.mxu0 %v492
      %515 = vmatprep.subr.bf16.mxu0 0
      %516 = vmatpush1.bf16.msra.mxu0 %v491
      %517 = vmatprep.subr.bf16.mxu0 0
      %518 = vmatpush1.bf16.msra.mxu0 %v490
      %519 = vmatprep.subr.bf16.mxu0 0
      %520 = vmatpush1.bf16.msra.mxu0 %v489
      %521 = vmatprep.subr.bf16.mxu0 0
      %522 = vmatpush2.bf16.msra.mxu0 0
      %523 = vmatprep.subr.bf16.mxu0 0
      %524 = vmatpush2.bf16.msra.mxu0 0
      %525 = vmatprep.subr.bf16.mxu0 0
      %526 = vmatpush2.bf16.msra.mxu0 0
      %527 = vmatprep.subr.bf16.mxu0 0
      %528 = vmatpush2.bf16.msra.mxu0 0
      %529 = vmatprep.subr.bf16.mxu0 0
      %530 = vmatpush2.bf16.msra.mxu0 0
      %531 = vmatprep.subr.bf16.mxu0 0
      %532 = vmatpush2.bf16.msra.mxu0 0
      %533 = vmatprep.subr.bf16.mxu0 0
      %534 = vmatpush2.bf16.msra.mxu0 0
      %535 = vmatprep.subr.bf16.mxu0 0
      %536 = vmatpush2.bf16.msra.mxu0 0
      %537 = vmatprep.mubr.bf16.mxu0 0
      %538 = vmatmul.mubr.bf16.gmra.mxu0 %v351
      %v539 = vpop.f32.mrf.mxu0
      %v540 = vadd.f32 %v450, %v539
      %v541 = vpop.f32.mrf.mxu0
      %v542 = vpop.f32.mrf.mxu0
      %v543 = vadd.f32 %v453, %v542
      %v544 = vpop.f32.mrf.mxu0
      %545 = vdwg.mxu0
      %v546 = vld [vmem:[#allocation2] sm:$0xe]
      %s547 = scalar_lea.vmem %s3, 128
      %v548 = vld [vmem:[%s547] sm:$0xf]
      %v549 = vld [vmem:[%s547 + $0x4] sm:$0xf]
      %v550 = vld [vmem:[%s547 + $0x8] sm:$0xf]
      %v551 = vld [vmem:[%s547 + $0xc] sm:$0xf]
      %v552 = vld [vmem:[%s547 + $0x10] sm:$0xf]
      %v553 = vld [vmem:[%s547 + $0x14] sm:$0xf]
      %v554 = vld [vmem:[%s547 + $0x18] sm:$0xf]
      %v555 = vld [vmem:[%s547 + $0x1c] sm:$0xf]
      %v556 = vld [vmem:[%s547 + $0x20] sm:$0xf]
      %v557 = vld [vmem:[%s547 + $0x24] sm:$0xf]
      %v558 = vld [vmem:[%s547 + $0x28] sm:$0xf]
      %v559 = vld [vmem:[%s547 + $0x2c] sm:$0xf]
      %v560 = vld [vmem:[%s547 + $0x30] sm:$0xf]
      %v561 = vld [vmem:[%s547 + $0x34] sm:$0xf]
      %v562 = vld [vmem:[%s547 + $0x38] sm:$0xf]
      %v563 = vld [vmem:[%s547 + $0x3c] sm:$0xf]
      %v565 = vunpack.c.l.b16 %v546
      %v566 = vpack.c.b16 %v349, %v565
      %vm567 = vcmask 1046528
      %v568 = vrot.slane %v566, 1
      %v569 = vrot.slane %v352, 1
      %v570 = vsel %vm567, %v568, %v569
      %v588 = vunpack.c.l.b16 %v548
      %v589 = vunpack.c.l.b16 %v549
      %v590 = vunpack.c.l.b16 %v550
      %v591 = vunpack.c.l.b16 %v551
      %v592 = vunpack.c.l.b16 %v552
      %v593 = vunpack.c.l.b16 %v553
      %v594 = vunpack.c.l.b16 %v554
      %v595 = vunpack.c.l.b16 %v555
      %v596 = vunpack.c.l.b16 %v556
      %v597 = vunpack.c.l.b16 %v557
      %v598 = vunpack.c.l.b16 %v558
      %v599 = vunpack.c.l.b16 %v559
      %v600 = vunpack.c.l.b16 %v560
      %v601 = vunpack.c.l.b16 %v561
      %v602 = vunpack.c.l.b16 %v562
      %v603 = vunpack.c.l.b16 %v563
      %v604 = vpack.c.b16 %v589, %v588
      %v605 = vpack.c.b16 %v591, %v590
      %v606 = vpack.c.b16 %v593, %v592
      %v607 = vpack.c.b16 %v595, %v594
      %v608 = vpack.c.b16 %v597, %v596
      %v609 = vpack.c.b16 %v599, %v598
      %v610 = vpack.c.b16 %v601, %v600
      %v611 = vpack.c.b16 %v603, %v602
      %620 = vmatprep.subr.bf16.mxu0 0
      %621 = vmatpush1.bf16.msra.mxu0 %v611
      %622 = vmatprep.subr.bf16.mxu0 0
      %623 = vmatpush1.bf16.msra.mxu0 %v610
      %624 = vmatprep.subr.bf16.mxu0 0
      %625 = vmatpush1.bf16.msra.mxu0 %v609
      %626 = vmatprep.subr.bf16.mxu0 0
      %627 = vmatpush1.bf16.msra.mxu0 %v608
      %628 = vmatprep.subr.bf16.mxu0 0
      %629 = vmatpush1.bf16.msra.mxu0 %v607
      %630 = vmatprep.subr.bf16.mxu0 0
      %631 = vmatpush1.bf16.msra.mxu0 %v606
      %632 = vmatprep.subr.bf16.mxu0 0
      %633 = vmatpush1.bf16.msra.mxu0 %v605
      %634 = vmatprep.subr.bf16.mxu0 0
      %635 = vmatpush1.bf16.msra.mxu0 %v604
      %636 = vmatprep.subr.bf16.mxu0 0
      %637 = vmatpush2.bf16.msra.mxu0 0
      %638 = vmatprep.subr.bf16.mxu0 0
      %639 = vmatpush2.bf16.msra.mxu0 0
      %640 = vmatprep.subr.bf16.mxu0 0
      %641 = vmatpush2.bf16.msra.mxu0 0
      %642 = vmatprep.subr.bf16.mxu0 0
      %643 = vmatpush2.bf16.msra.mxu0 0
      %644 = vmatprep.subr.bf16.mxu0 0
      %645 = vmatpush2.bf16.msra.mxu0 0
      %646 = vmatprep.subr.bf16.mxu0 0
      %647 = vmatpush2.bf16.msra.mxu0 0
      %648 = vmatprep.subr.bf16.mxu0 0
      %649 = vmatpush2.bf16.msra.mxu0 0
      %650 = vmatprep.subr.bf16.mxu0 0
      %651 = vmatpush2.bf16.msra.mxu0 0
      %652 = vmatprep.mubr.bf16.mxu0 0
      %653 = vmatmul.mubr.bf16.gmra.mxu0 %v570
      %v654 = vpop.f32.mrf.mxu0
      %v655 = vadd.f32 0.0, %v654
      %v656 = vpop.f32.mrf.mxu0
      %v657 = vpop.f32.mrf.mxu0
      %v658 = vadd.f32 0.0, %v657
      %v659 = vpop.f32.mrf.mxu0
      %660 = vdwg.mxu0
      %v661 = vadd.f32 %v540, %v655
      %v662 = vadd.f32 %v543, %v658
      %v663 = vpack.c.bf16 %v662, %v661
      %v665 = vunpack.c.l.b16 %v663
      %v666 = vunpack.c.h.b16 %v663
      %v667 = vpack.c.b16 %v665, %v665
      %v668 = vpack.c.b16 %v666, %v666
      %671 = vst [vmem:[%s231] sm:$0xf] %v667
      %672 = vst [vmem:[%s231 + $0x4] sm:$0xf] %v668
      %v673 = vadd.f32 %v661, %v662
      %v674 = vrot.slane %v673, 4
      %v675 = vadd.f32 %v673, %v674
      %v676 = vrot.slane %v675, 2
      %v677 = vadd.f32 %v675, %v676
      %v678 = vrot.slane %v677, 1
      %v679 = vadd.f32 %v677, %v678
      %v680 = vmul.f32 %v661, %v661
      %v681 = vmul.f32 %v662, %v662
      %v682 = vadd.f32 %v680, %v681
      %v683 = vrot.slane %v682, 4
      %v684 = vadd.f32 %v682, %v683
      %v685 = vrot.slane %v684, 2
      %v686 = vadd.f32 %v684, %v685
      %v687 = vrot.slane %v686, 1
      %v688 = vadd.f32 %v686, %v687
      %vm689 = vcmask 1040384
      %v690 = vsel %vm689, %v679, %v688
      %691 = vst [vmem:[%s235] sm:$0x3] %v690
      %p692 = scmp.lt.s32.totalorder %s17, 1
      %s693 = scalar_select %p692, %s17, 1
      %s694 = smul.addr %s693, 2
      %s695 = smul.addr %s694, 4
      %s696 = scalar_lea.vmem %s4, %s695
      %p697 = scmp.lt.s32.totalorder %s17, 1
      %s698 = scalar_select %p697, %s17, 1
      %s699 = smul.addr %s698, 2
      %s700 = scalar_lea.vmem %s5, %s699
      // Predicated region
      $region37: #{basic_block_forward.4} parent=35 // pred_check
        %p701 = pneg %p124
      $region38: #{basic_block_forward.4} parent=35 // pred_check_branch
        %703 = sbr.rel (%p701) target = $region40
      $region39: #{basic_block_forward.4} parent=35 // pred_region
        _
      $region40: #{basic_block_forward.4} parent=35 // pred_fallthru
        _
      // Predicated region
      $region41: #{basic_block_forward.4} parent=35 // pred_check
        %p704 = pneg %p150
      $region42: #{basic_block_forward.4} parent=35 // pred_check_branch
        %706 = sbr.rel (%p704) target = $region44
      $region43: #{basic_block_forward.4} parent=35 // pred_region
        _
      $region44: #{basic_block_forward.4} parent=35 // pred_fallthru
        _
    $region36: #{basic_block_forward.4} parent=5 // pred_fallthru
      _
    %p707 = scmp.le.s32.totalorder 2, %s12
    // Predicated region
    $region45: #{basic_block_forward.4} parent=5 // pred_check
      %p708 = pneg %p707
    $region46: #{basic_block_forward.4} parent=5 // pred_check_branch
      %710 = sbr.rel (%p708) target = $region48
    $region47: #{basic_block_forward.4} parent=5 // pred_region
      %s711 = ssub.s32 %s12, 2
      // Predicated region
      $region49: #{basic_block_forward.4} parent=47 // pred_check
        %p712 = pneg %p130
      $region50: #{basic_block_forward.4} parent=47 // pred_check_branch
        %714 = sbr.rel (%p712) target = $region52
      $region51: #{basic_block_forward.4} parent=47 // pred_region
        %p715 = scmp.lt.s32.totalorder %s18, 1
        %s716 = scalar_select %p715, %s18, 1
        %s717 = smul.addr %s716, 2
        %s718 = smul.addr %s717, 4
        %s719 = scalar_lea.vmem %s4, %s718
      $region52: #{basic_block_forward.4} parent=47 // pred_fallthru
        _
      // Predicated region
      $region53: #{basic_block_forward.4} parent=47 // pred_check
        %p720 = pneg %p156
      $region54: #{basic_block_forward.4} parent=47 // pred_check_branch
        %722 = sbr.rel (%p720) target = $region56
      $region55: #{basic_block_forward.4} parent=47 // pred_region
        %p723 = scmp.lt.s32.totalorder %s18, 1
        %s724 = scalar_select %p723, %s18, 1
        %s725 = smul.addr %s724, 2
        %s726 = scalar_lea.vmem %s5, %s725
      $region56: #{basic_block_forward.4} parent=47 // pred_fallthru
        _
    $region48: #{basic_block_forward.4} parent=5 // pred_fallthru
      _
  $region6: #{basic_block_forward.4} parent=0 // loop_footer
    %s16 = sadd.s32 1, %s12
  $region7: #{basic_block_forward.4} parent=0 // loop_footer_branch
    %11 = sbr.rel target = $region3
  $region8: #{basic_block_forward.4} parent=0 // loop_exit
    _

</llo_original>
